<compile_context>
chip_gen: v7x
topology: tpu7x:2x2x1
jax: 0.10.0
libtpu: 0.0.40
codegen_flags: <defaults>
</compile_context>

<pallas_src>
import functools

import jax
import jax.numpy as jnp
from jax.experimental import pallas as pl
from jax.experimental.pallas import tpu as pltpu


def _round_up(x, m):
    return (x + m - 1) // m * m


def _vmem_limit_bytes():
    """Generation-aware scoped-VMEM limit (~75% of physical VMEM)."""
    try:
        cap = pltpu.get_tpu_info().vmem_capacity_bytes
    except Exception:  # introspection unavailable -> conservative (safe on v7x)
        cap = 64 * 1024 * 1024
    return int(cap) * 3 // 4


def _pick_batch_tile(n_rows8, dim_p, x_itemsize, w_itemsize, vmem_limit):
    """Largest batch tile (multiple of 8 rows) whose per-step VMEM estimate fits."""

    def fits(tm):
        weights = 2 * (dim_p * 2 * dim_p) * w_itemsize          # double-buffered [Dp, 2Dp]
        biases = 2 * (2 * dim_p) * 4
        acts = tm * dim_p * (2 * x_itemsize + 2 * x_itemsize + 4)  # x dbuf + out dbuf + h scratch
        inter = 4 * tm * (2 * dim_p) * 4                        # z / gate / nonlinear headroom
        return weights + biases + acts + inter <= int(vmem_limit * 0.8)

    candidates = [c for c in (256, 128, 64, 32, 16, 8) if c < n_rows8]
    if n_rows8 <= 256:
        candidates = [n_rows8] + candidates
    for tm in candidates:
        if fits(tm):
            return tm
    return 8


# ----------------------------------------------------------------------------
# Packing (hoisted out of the per-call forward path -- call once at load time)
# ----------------------------------------------------------------------------
def pack_highway_params(wl, bl, wg, bg, *, weight_dtype=jnp.bfloat16):
    """Pre-pack Highway weights.

    Args (PyTorch layout already transposed to x @ W form):
      wl, wg: [L, D, D]   (wl[i] = linear[i].weight.T, wg[i] = gate[i].weight.T)
      bl, bg: [L, D] or [L, 1, D]
    Returns (w_cat, b_cat, dim):
      w_cat: [L, Dp, 2*Dp] weight_dtype, layout [Wg | Wl], Dp = round_up(D, 128)
      b_cat: [L, 1, 2*Dp] f32, layout [bg | bl]
      dim:   original feature dim D
    Zero padding to Dp is exact: padded h columns start at 0 and stay 0
    (gate=0.5, nonlinear=0 -> 0.5*0 = 0) and padded weight rows are zero so
    they never touch the real columns.
    """
    L, D, _ = wl.shape
    bl = jnp.asarray(bl).reshape(L, 1, D).astype(jnp.float32)
    bg = jnp.asarray(bg).reshape(L, 1, D).astype(jnp.float32)
    Dp = _round_up(D, 128)
    pad = Dp - D
    if pad:
        wl = jnp.pad(wl, ((0, 0), (0, pad), (0, pad)))
        wg = jnp.pad(wg, ((0, 0), (0, pad), (0, pad)))
        bl = jnp.pad(bl, ((0, 0), (0, 0), (0, pad)))
        bg = jnp.pad(bg, ((0, 0), (0, 0), (0, pad)))
    w_cat = jnp.concatenate([wg, wl], axis=-1).astype(weight_dtype)  # [L, Dp, 2Dp]
    b_cat = jnp.concatenate([bg, bl], axis=-1)                       # [L, 1, 2Dp] f32
    return w_cat, b_cat, D


# ----------------------------------------------------------------------------
# Kernel: one (batch_tile, layer) grid step = one fused matmul + highway blend
# ----------------------------------------------------------------------------
def _highway_kernel(x_ref, w_ref, b_ref, out_ref, h_ref, *, dim_p, num_layers):
    layer = pl.program_id(1)

    @pl.when(layer == 0)
    def _():
        h_ref[...] = x_ref[...].astype(jnp.float32)

    h = h_ref[...]                                              # (tm, Dp) f32
    # One fused matmul per layer: z = h @ [Wg | Wl] + [bg | bl]   (f32 acc)
    z = jnp.dot(h.astype(w_ref.dtype), w_ref[...],
                preferred_element_type=jnp.float32) + b_ref[...]
    # sigmoid(x) = 0.5*(tanh(0.5*x)+1): a single EUP op (vs exp + divide).
    gate = 0.5 * (jnp.tanh(0.5 * z[:, :dim_p]) + 1.0)
    nonlinear = jnp.maximum(z[:, dim_p:], 0.0)                  # relu (VPU)
    h_ref[...] = h + gate * (nonlinear - h)                     # highway blend

    @pl.when(layer == num_layers - 1)
    def _():
        out_ref[...] = h_ref[...].astype(out_ref.dtype)         # lane-dense store


# ----------------------------------------------------------------------------
# Forward with pre-packed params (the hot path)
# ----------------------------------------------------------------------------
def highway_forward_packed(x, w_cat, b_cat, dim):
    """x: [N, dim]; w_cat/b_cat from pack_highway_params."""
    N, D = x.shape
    if D != dim:
        raise ValueError(f"feature dim mismatch: x has {D}, packed params expect {dim}")
    L, Dp, two_dp = w_cat.shape
    assert two_dp == 2 * Dp, "w_cat must be [L, Dp, 2*Dp]"

    vmem_limit = _vmem_limit_bytes()
    n_rows8 = _round_up(max(N, 8), 8)
    tm = _pick_batch_tile(n_rows8, Dp, x.dtype.itemsize,
                          w_cat.dtype.itemsize, vmem_limit)
    Np = _round_up(n_rows8, tm)
    n_bt = Np // tm

    xp = x
    if Np != N or Dp != D:
        xp = jnp.pad(x, ((0, Np - N), (0, Dp - D)))

    kernel = functools.partial(_highway_kernel, dim_p=Dp, num_layers=L)

    out = pl.pallas_call(
        kernel,
        out_shape=jax.ShapeDtypeStruct((Np, Dp), x.dtype),
        grid_spec=pltpu.PrefetchScalarGridSpec(
            num_scalar_prefetch=0,
            grid=(n_bt, L),                     # layer (carried) axis last
            in_specs=[
                # x tile: resident across the layer axis, read only at layer 0.
                pl.BlockSpec((tm, Dp), lambda b, l: (b, 0)),
                # [Wg_l | Wl_l]: one (Dp, 2Dp) slab streamed (double-buffered)
                # per layer.
                # TODO(synk): for very large Dp (>~2048 on v7x) add a column-
                # tiling grid axis over matched (Wg, Wl) column pairs so the
                # double-buffered slab stays within 64 MiB VMEM.
                # TODO(synk): on v5e sweep pipeline_mode=pl.Buffered(3) here.
                pl.BlockSpec((pl.Squeezed(), Dp, 2 * Dp), lambda b, l: (l, 0, 0)),
                # [bg_l | bl_l]
                pl.BlockSpec((pl.Squeezed(), 1, 2 * Dp), lambda b, l: (l, 0, 0)),
            ],
            out_specs=pl.BlockSpec((tm, Dp), lambda b, l: (b, 0)),
            scratch_shapes=[pltpu.VMEM((tm, Dp), jnp.float32)],   # running h
        ),
        compiler_params=pltpu.CompilerParams(
            dimension_semantics=("parallel", "arbitrary"),
            vmem_limit_bytes=vmem_limit,
        ),
    )(xp, w_cat, b_cat)

    if Np != N or Dp != D:
        out = out[:N, :D]
    return out


def highway_forward(x, wl, bl, wg, bg, *, weight_dtype=jnp.bfloat16):
    """Convenience wrapper. NOTE: re-packs weights on every call -- in a real
    model call pack_highway_params() once and use highway_forward_packed."""
    w_cat, b_cat, dim = pack_highway_params(wl, bl, wg, bg,
                                            weight_dtype=weight_dtype)
    return highway_forward_packed(x, w_cat, b_cat, dim)


# ----------------------------------------------------------------------------
# Pure-JAX reference (mirrors the PyTorch module, same bf16 weight cast)
# ----------------------------------------------------------------------------
def highway_reference(x, wl, bl, wg, bg, *, weight_dtype=jnp.bfloat16):
    L, D, _ = wl.shape
    bl = jnp.asarray(bl).reshape(L, 1, D)
    bg = jnp.asarray(bg).reshape(L, 1, D)
    h = x.astype(jnp.float32)
    for i in range(L):
        hq = h.astype(weight_dtype)
        gate = jax.nn.sigmoid(
            jnp.dot(hq, wg[i].astype(weight_dtype),
                    preferred_element_type=jnp.float32) + bg[i])
        nonlinear = jax.nn.relu(
            jnp.dot(hq, wl[i].astype(weight_dtype),
                    preferred_element_type=jnp.float32) + bl[i])
        h = gate * nonlinear + (1.0 - gate) * h
    return h.astype(x.dtype)


if __name__ == "__main__":
    # --- Test 1: tile-aligned shapes (D multiple of 128) -------------------
    layer_num = 3
    N, D = 128, 256

    key = jax.random.PRNGKey(0)
    kx, kwl, kbl, kwg, kbg, k2 = jax.random.split(key, 6)

    bound = 1.0 / (D ** 0.5)  # mimic PyTorch nn.Linear default init scale
    x = jax.random.normal(kx, (N, D), dtype=jnp.float32)
    # PyTorch weight is [out, in]; store the transposed [in, out] per layer so
    # the kernel computes x @ W directly.
    wl = jax.random.uniform(kwl, (layer_num, D, D), jnp.float32, -bound, bound)
    wg = jax.random.uniform(kwg, (layer_num, D, D), jnp.float32, -bound, bound)
    bl = jax.random.uniform(kbl, (layer_num, 1, D), jnp.float32, -bound, bound)
    bg = jax.random.uniform(kbg, (layer_num, 1, D), jnp.float32, -bound, bound)

    # Pack once (hoisted out of the forward path).
    w_cat, b_cat, dim = pack_highway_params(wl, bl, wg, bg)
    fwd = jax.jit(functools.partial(highway_forward_packed, dim=dim))

    ref = highway_reference(x, wl, bl, wg, bg)
    out = fwd(x, w_cat, b_cat)
    jax.block_until_ready(out)
    assert out.shape == (N, D) and out.dtype == x.dtype
    assert jnp.allclose(out, ref, atol=2e-3, rtol=2e-3), \
        "kernel mismatch vs reference (aligned case)"

    # --- Test 2: non-128-aligned dim (PyTorch default dim=600 style) -------
    L2, N2, D2 = 2, 40, 200
    kx2, kwl2, kbl2, kwg2, kbg2 = jax.random.split(k2, 5)
    bound2 = 1.0 / (D2 ** 0.5)
    x2 = jax.random.normal(kx2, (N2, D2), dtype=jnp.float32)
    wl2 = jax.random.uniform(kwl2, (L2, D2, D2), jnp.float32, -bound2, bound2)
    wg2 = jax.random.uniform(kwg2, (L2, D2, D2), jnp.float32, -bound2, bound2)
    bl2 = jax.random.uniform(kbl2, (L2, 1, D2), jnp.float32, -bound2, bound2)
    bg2 = jax.random.uniform(kbg2, (L2, 1, D2), jnp.float32, -bound2, bound2)

    ref2 = highway_reference(x2, wl2, bl2, wg2, bg2)
    out2 = highway_forward(x2, wl2, bl2, wg2, bg2)  # convenience path (packs inline)
    jax.block_until_ready(out2)
    assert out2.shape == (N2, D2) and out2.dtype == x2.dtype
    assert jnp.allclose(out2, ref2, atol=2e-3, rtol=2e-3), \
        "kernel mismatch vs reference (padded case)"

    print("KERNEL_OK")
</pallas_src>

<mosaic_0001>
module attributes {stable_mosaic.version = 11 : i64} {
  func.func @_highway_kernel(%arg0: i32, %arg1: i32, %arg2: memref<128x256xf32, #tpu.memory_space<vmem>>, %arg3: memref<1x256x512xbf16, #tpu.memory_space<vmem>>, %arg4: memref<1x1x512xf32, #tpu.memory_space<vmem>>, %arg5: memref<128x256xf32, #tpu.memory_space<vmem>>, %arg6: memref<128x256xf32, #tpu.memory_space<vmem>>) attributes {dimension_semantics = [#tpu.dimension_semantics<parallel>, #tpu.dimension_semantics<arbitrary>], iteration_bounds = array<i64: 1, 3>, scalar_prefetch = 0 : i64, scratch_operands = 1 : i64, tpu.core_type = #tpu.core_type<tc>, window_params = [{transform_indices = @transform_0, window_bounds = array<i64: 128, 256>}, {transform_indices = @transform_1, window_bounds = array<i64: 1, 256, 512>}, {transform_indices = @transform_2, window_bounds = array<i64: 1, 1, 512>}, {transform_indices = @transform_3, window_bounds = array<i64: 128, 256>}]} {
    %c0_i32 = arith.constant 0 : i32
    %0 = arith.cmpi eq, %arg1, %c0_i32 : i32
    %1 = arith.extui %0 : i1 to i32
    %c0_i32_0 = arith.constant 0 : i32
    %2 = arith.cmpi ne, %1, %c0_i32_0 : i32
    scf.if %2 {
      %c0_15 = arith.constant 0 : index
      %c0_16 = arith.constant 0 : index
      %30 = vector.load %arg2[%c0_15, %c0_16] : memref<128x256xf32, #tpu.memory_space<vmem>>, vector<128x256xf32>
      %c0_17 = arith.constant 0 : index
      %c0_18 = arith.constant 0 : index
      %31 = vector.load %arg6[%c0_17, %c0_18] : memref<128x256xf32, #tpu.memory_space<vmem>>, vector<128x256xf32>
      tpu.vector_store %arg6[%c0_17, %c0_18], %30 {strides = array<i32>} : memref<128x256xf32, #tpu.memory_space<vmem>>, vector<128x256xf32>,
    } else {
    }
    %c0 = arith.constant 0 : index
    %c0_1 = arith.constant 0 : index
    %3 = vector.load %arg6[%c0, %c0_1] : memref<128x256xf32, #tpu.memory_space<vmem>>, vector<128x256xf32>
    %4 = arith.truncf %3 : vector<128x256xf32> to vector<128x256xbf16>
    %c0_2 = arith.constant 0 : index
    %c0_3 = arith.constant 0 : index
    %c0_4 = arith.constant 0 : index
    %5 = vector.load %arg3[%c0_2, %c0_3, %c0_4] : memref<1x256x512xbf16, #tpu.memory_space<vmem>>, vector<1x256x512xbf16>
    %6 = vector.shape_cast %5 : vector<1x256x512xbf16> to vector<256x512xbf16>
    %cst = arith.constant dense<0.000000e+00> : vector<128x512xf32>
    %7 = tpu.matmul %4, %6, %cst {dimension_numbers = #tpu.dot_dimension_numbers<[1], [0], [0], [1], [0, 0, 1, 1], [], []>} : vector<128x256xbf16>, vector<256x512xbf16>, vector<128x512xf32> -> vector<128x512xf32>
    %c0_5 = arith.constant 0 : index
    %c0_6 = arith.constant 0 : index
    %c0_7 = arith.constant 0 : index
    %8 = vector.load %arg4[%c0_5, %c0_6, %c0_7] : memref<1x1x512xf32, #tpu.memory_space<vmem>>, vector<1x1x512xf32>
    %9 = vector.shape_cast %8 : vector<1x1x512xf32> to vector<1x512xf32>
    %10 = vector.broadcast %9 : vector<1x512xf32> to vector<128x512xf32>
    %11 = arith.addf %7, %10 : vector<128x512xf32>
    %12 = vector.extract_strided_slice %11 {offsets = [0, 0], sizes = [128, 256], strides = [1, 1]} : vector<128x512xf32> to vector<128x256xf32>
    %cst_8 = arith.constant 5.000000e-01 : f32
    %13 = vector.broadcast %cst_8 : f32 to vector<128x256xf32>
    %14 = arith.mulf %13, %12 : vector<128x256xf32>
    %15 = math.tanh %14 : vector<128x256xf32>
    %cst_9 = arith.constant 1.000000e+00 : f32
    %16 = vector.broadcast %cst_9 : f32 to vector<128x256xf32>
    %17 = arith.addf %15, %16 : vector<128x256xf32>
    %cst_10 = arith.constant 5.000000e-01 : f32
    %18 = vector.broadcast %cst_10 : f32 to vector<128x256xf32>
    %19 = arith.mulf %18, %17 : vector<128x256xf32>
    %20 = vector.extract_strided_slice %11 {offsets = [0, 256], sizes = [128, 256], strides = [1, 1]} : vector<128x512xf32> to vector<128x256xf32>
    %cst_11 = arith.constant 0.000000e+00 : f32
    %21 = vector.broadcast %cst_11 : f32 to vector<128x256xf32>
    %22 = arith.maximumf %20, %21 : vector<128x256xf32>
    %23 = arith.subf %22, %3 : vector<128x256xf32>
    %24 = arith.mulf %19, %23 : vector<128x256xf32>
    %25 = arith.addf %3, %24 : vector<128x256xf32>
    %c0_12 = arith.constant 0 : index
    %c0_13 = arith.constant 0 : index
    %26 = vector.load %arg6[%c0_12, %c0_13] : memref<128x256xf32, #tpu.memory_space<vmem>>, vector<128x256xf32>
    tpu.vector_store %arg6[%c0_12, %c0_13], %25 {strides = array<i32>} : memref<128x256xf32, #tpu.memory_space<vmem>>, vector<128x256xf32>,
    %c2_i32 = arith.constant 2 : i32
    %27 = arith.cmpi eq, %arg1, %c2_i32 : i32
    %28 = arith.extui %27 : i1 to i32
    %c0_i32_14 = arith.constant 0 : i32
    %29 = arith.cmpi ne, %28, %c0_i32_14 : i32
    scf.if %29 {
      %c0_15 = arith.constant 0 : index
      %c0_16 = arith.constant 0 : index
      %30 = vector.load %arg6[%c0_15, %c0_16] : memref<128x256xf32, #tpu.memory_space<vmem>>, vector<128x256xf32>
      %c0_17 = arith.constant 0 : index
      %c0_18 = arith.constant 0 : index
      %31 = vector.load %arg5[%c0_17, %c0_18] : memref<128x256xf32, #tpu.memory_space<vmem>>, vector<128x256xf32>
      tpu.vector_store %arg5[%c0_17, %c0_18], %30 {strides = array<i32>} : memref<128x256xf32, #tpu.memory_space<vmem>>, vector<128x256xf32>,
    } else {
    }
    return
  }
  func.func @transform_0(%arg0: i32, %arg1: i32) -> (i32, i32) {
    %c0_i32 = arith.constant 0 : i32
    %c0_i32_0 = arith.constant 0 : i32
    return %arg0, %c0_i32 : i32, i32
  }
  func.func @transform_1(%arg0: i32, %arg1: i32) -> (i32, i32, i32) {
    %c0_i32 = arith.constant 0 : i32
    %c0_i32_0 = arith.constant 0 : i32
    %c0_i32_1 = arith.constant 0 : i32
    return %arg1, %c0_i32, %c0_i32_0 : i32, i32, i32
  }
  func.func @transform_2(%arg0: i32, %arg1: i32) -> (i32, i32, i32) {
    %c0_i32 = arith.constant 0 : i32
    %c0_i32_0 = arith.constant 0 : i32
    %c0_i32_1 = arith.constant 0 : i32
    return %arg1, %c0_i32, %c0_i32_0 : i32, i32, i32
  }
  func.func @transform_3(%arg0: i32, %arg1: i32) -> (i32, i32) {
    %c0_i32 = arith.constant 0 : i32
    %c0_i32_0 = arith.constant 0 : i32
    return %arg0, %c0_i32 : i32, i32
  }
}

</mosaic_0001>

<llo_original>
// kernel: highway_forward_packed.1
$region0: #{highway_forward_packed.1}
  #allocation0 [shape = 'u32[]', space=smem, size = 0x4, offset = 0x4, fixed_abs, tag = 'smem constant byte address 0x4 - core index']
  #allocation1 [shape = 'u32[144,128]{1,0:T(1,128)}', space=vmem, size = 0x12000, scoped, tag = 'internal scratch']
  #allocation2 [shape = 'f32[128,256]{1,0:T(8,128)}', space=vmem, size = 0x20000, scoped, tag = 'scratch operand']
  %s0 = inlined_call_operand.hbm [shape: f32[128,256], index: 0, kind: input, shape index: {}]
  %s1 = inlined_call_operand.hbm [shape: bf16[3,256,512], index: 1, kind: input, shape index: {}]
  %s2 = inlined_call_operand.hbm [shape: f32[3,1,512], index: 2, kind: input, shape index: {}]
  %s3 = inlined_call_operand.hbm [shape: f32[128,256], index: 3, kind: output, shape index: {}]
  %s4 = sld [smem:[#allocation0]]
  $region65: #{highway_forward_packed.1} parent=0
    _
  %s6 = ssub.s32 1, %s4
  %s7 = scalar_select 0, %s6, %s4
  $region1: #{highway_forward_packed.1} parent=0
    #allocation3 [shape = 'u8[131072]{0}', space=vmem, size = 0x20000, scoped, tag = 'input window, operand 0, single buffered']
    #allocation4 [shape = 's32[2]{0}', space=sflag, size = 0x8, scoped, tag = 'scoped memory for highway_forward_packed.1']
    #allocation5 [shape = 's32[2]{0}', space=sflag, size = 0x8, scoped, tag = 'scoped memory for highway_forward_packed.1']
    #allocation6 [shape = 'u8[524288]{0}', space=vmem, size = 0x80000, scoped, tag = 'input window, operand 1']
    #allocation7 [shape = 's32[2]{0}', space=sflag, size = 0x8, scoped, tag = 'scoped memory for highway_forward_packed.1']
    #allocation8 [shape = 'u8[4096]{0}', space=vmem, size = 0x1000, scoped, tag = 'input window, operand 2']
    #allocation9 [shape = 'u8[131072]{0}', space=vmem, size = 0x20000, scoped, tag = 'output window, operand 0, single buffered']
    %8 = vsyncpa [#allocation4], 0
    %9 = vsyncpa [#allocation7], 0
    %s10 = scalar_lea.sflag [#allocation7], 1
    %11 = vsyncpa %s10, 0
    %12 = vsyncpa [#allocation5], 0
    loop: start=0, step=1, limit=5
    $region2: #{highway_forward_packed.1} parent=1 // loop_pre_header
      _
    $region3: #{highway_forward_packed.1} parent=1 // loop_header
      %s14 = sphi 0, %s18
      %p15 = scmp.ge.s32.totalorder %s14, 5
      %s21 = sphi 0, %s33
      %s22 = sphi 0, %s29
      %s23 = sphi 0, %s21
      %s24 = sphi 0, %s22
      %s25 = sphi 0, %s23
      %s26 = sphi 0, %s24
      %s36 = sphi 0, %s38
      %s39 = sphi 0, %s36
      %s40 = sphi 0, %s39
      %s56 = sphi 0, %s40
      %s62 = sphi 0, %s64
      %s65 = sphi 0, %s62
      %s66 = sphi 0, %s65
      %s82 = sphi 0, %s66
      %s88 = sphi 0, %s90
      %s91 = sphi 0, %s88
      %s92 = sphi 0, %s91
      %s108 = sphi 0, %s92
      %s114 = sphi 0, %s116
      %s117 = sphi 0, %s114
      %s118 = sphi 0, %s117
      %s134 = sphi 0, %s118
    $region4: #{highway_forward_packed.1} parent=1 // loop_header_branch
      %17 = sbr.rel (%p15) target = $region8
    $region5: #{highway_forward_packed.1} parent=1 // loop_body
      %s19 = ssub.s32 %s14, 1
      %s20 = ssub.s32 %s14, 2
      %s27 = sadd.s32 1, %s22
      %p28 = scmp.ge.s32.totalorder %s27, 3
      %s29 = scalar_select %p28, 0, %s27
      %s30 = sadd.s32 1, %s21
      %s31 = scalar_select %p28, %s30, %s21
      %p32 = scmp.ge.s32.totalorder %s31, 1
      %s33 = scalar_select %p32, 0, %s31
      %s34 = ssub.s32 %s21, %s33
      %p35 = scmp.eq.s32.totalorder %s34, 0
      %s37 = sadd.s32 %s36, 1
      %s38 = scalar_select %p35, %s36, %s37
      %p41 = pneg %p35
      %p42 = scmp.eq.s32.totalorder %s14, 2
      %p43 = por %p41, %p42
      %p44 = scmp.ne.s32.totalorder %s36, %s39
      %p45 = scmp.eq.s32.totalorder %s14, 0
      %p46 = por %p44, %p45
      %p47 = scmp.ne.s32.totalorder %s36, %s39
      %p48 = scmp.eq.s32.totalorder %s19, 2
      %p49 = por %p47, %p48
      %p50 = scmp.ne.s32.totalorder %s39, %s40
      %p51 = scmp.eq.s32.totalorder %s19, 0
      %p52 = por %p50, %p51
      %p53 = scmp.ne.s32.totalorder %s39, %s40
      %p54 = scmp.eq.s32.totalorder %s20, 2
      %p55 = por %p53, %p54
      %p57 = scmp.ne.s32.totalorder %s40, %s56
      %p58 = scmp.eq.s32.totalorder %s20, 0
      %p59 = por %p57, %p58
      %s60 = ssub.s32 %s22, %s29
      %p61 = scmp.eq.s32.totalorder %s60, 0
      %s63 = sadd.s32 %s62, 1
      %s64 = scalar_select %p61, %s62, %s63
      %p67 = pneg %p61
      %p68 = scmp.eq.s32.totalorder %s14, 2
      %p69 = por %p67, %p68
      %p70 = scmp.ne.s32.totalorder %s62, %s65
      %p71 = scmp.eq.s32.totalorder %s14, 0
      %p72 = por %p70, %p71
      %p73 = scmp.ne.s32.totalorder %s62, %s65
      %p74 = scmp.eq.s32.totalorder %s19, 2
      %p75 = por %p73, %p74
      %p76 = scmp.ne.s32.totalorder %s65, %s66
      %p77 = scmp.eq.s32.totalorder %s19, 0
      %p78 = por %p76, %p77
      %p79 = scmp.ne.s32.totalorder %s65, %s66
      %p80 = scmp.eq.s32.totalorder %s20, 2
      %p81 = por %p79, %p80
      %p83 = scmp.ne.s32.totalorder %s66, %s82
      %p84 = scmp.eq.s32.totalorder %s20, 0
      %p85 = por %p83, %p84
      %s86 = ssub.s32 %s22, %s29
      %p87 = scmp.eq.s32.totalorder %s86, 0
      %s89 = sadd.s32 %s88, 1
      %s90 = scalar_select %p87, %s88, %s89
      %p93 = pneg %p87
      %p94 = scmp.eq.s32.totalorder %s14, 2
      %p95 = por %p93, %p94
      %p96 = scmp.ne.s32.totalorder %s88, %s91
      %p97 = scmp.eq.s32.totalorder %s14, 0
      %p98 = por %p96, %p97
      %p99 = scmp.ne.s32.totalorder %s88, %s91
      %p100 = scmp.eq.s32.totalorder %s19, 2
      %p101 = por %p99, %p100
      %p102 = scmp.ne.s32.totalorder %s91, %s92
      %p103 = scmp.eq.s32.totalorder %s19, 0
      %p104 = por %p102, %p103
      %p105 = scmp.ne.s32.totalorder %s91, %s92
      %p106 = scmp.eq.s32.totalorder %s20, 2
      %p107 = por %p105, %p106
      %p109 = scmp.ne.s32.totalorder %s92, %s108
      %p110 = scmp.eq.s32.totalorder %s20, 0
      %p111 = por %p109, %p110
      %s112 = ssub.s32 %s21, %s33
      %p113 = scmp.eq.s32.totalorder %s112, 0
      %s115 = sadd.s32 %s114, 1
      %s116 = scalar_select %p113, %s114, %s115
      %p119 = pneg %p113
      %p120 = scmp.eq.s32.totalorder %s14, 2
      %p121 = por %p119, %p120
      %p122 = scmp.ne.s32.totalorder %s114, %s117
      %p123 = scmp.eq.s32.totalorder %s14, 0
      %p124 = por %p122, %p123
      %p125 = scmp.ne.s32.totalorder %s114, %s117
      %p126 = scmp.eq.s32.totalorder %s19, 2
      %p127 = por %p125, %p126
      %p128 = scmp.ne.s32.totalorder %s117, %s118
      %p129 = scmp.eq.s32.totalorder %s19, 0
      %p130 = por %p128, %p129
      %p131 = scmp.ne.s32.totalorder %s117, %s118
      %p132 = scmp.eq.s32.totalorder %s20, 2
      %p133 = por %p131, %p132
      %p135 = scmp.ne.s32.totalorder %s118, %s134
      %p136 = scmp.eq.s32.totalorder %s20, 0
      %p137 = por %p135, %p136
      %p138 = scmp.le.s32.totalorder 1, %s14
      %p139 = scmp.lt.s32.totalorder %s14, 4
      %p140 = pnand %p138, %p139
      %p141 = pneg %p140
      // Predicated region
      $region9: #{highway_forward_packed.1} parent=5 // pred_check
        _
      $region10: #{highway_forward_packed.1} parent=5 // pred_check_branch
        %143 = sbr.rel (%p140) target = $region12
      $region11: #{highway_forward_packed.1} parent=5 // pred_region
        %s144 = ssub.s32 %s14, 1
        // Predicated region
        $region13: #{highway_forward_packed.1} parent=11 // pred_check
          %p145 = pneg %p52
        $region14: #{highway_forward_packed.1} parent=11 // pred_check_branch
          %147 = sbr.rel (%p145) target = $region16
        $region15: #{highway_forward_packed.1} parent=11 // pred_region
          %s148 = smul.u32 16, %s23
          %s150 = ssub.s32 4096, 4096
          %151 = vsyncadd [#allocation4], %s150
          %s152 = smul.addr %s148, 2
          %s153 = smul.addr %s152, 128
          %s154 = scalar_lea.hbm %s0, %s153
          %s155 = sshll.u32 [#allocation3], 4
          %s156 = int_to_ptr.vmem [resolvable:$true] %s155
          %161 = dma.hbm_to_vmem [thread:$0]  %s154, 4096, %s156, [#allocation4], 256, 256, 16
        $region16: #{highway_forward_packed.1} parent=11 // pred_fallthru
          _
      $region12: #{highway_forward_packed.1} parent=5 // pred_fallthru
        _
      %p162 = scmp.lt.s32.totalorder %s14, 3
      // Predicated region
      $region17: #{highway_forward_packed.1} parent=5 // pred_check
        %p163 = pneg %p162
      $region18: #{highway_forward_packed.1} parent=5 // pred_check_branch
        %165 = sbr.rel (%p163) target = $region20
      $region19: #{highway_forward_packed.1} parent=5 // pred_region
        // Predicated region
        $region21: #{highway_forward_packed.1} parent=19 // pred_check
          %p166 = pneg %p72
        $region22: #{highway_forward_packed.1} parent=19 // pred_check_branch
          %168 = sbr.rel (%p166) target = $region24
        $region23: #{highway_forward_packed.1} parent=19 // pred_region
          %s169 = sand.u32 %s14, 1
          %s170 = scalar_lea.sflag [#allocation7], %s169
          %s171 = sand.u32 %s62, 1
          %s172 = smul.addr %s171, 512
          %s173 = scalar_lea.vmem [#allocation6], %s172
          %s175 = ssub.s32 8192, 8192
          %176 = vsyncadd %s170, %s175
          %s177 = smul.addr %s22, 128
          %s178 = smul.addr %s177, 64
          %s179 = scalar_lea.hbm %s1, %s178
          %s180 = sshll.u32 %s173, 4
          %s181 = int_to_ptr.vmem [resolvable:$true] %s180
          %186 = dma.hbm_to_vmem [thread:$0]  %s179, 8192, %s181, %s170, 256, 256, 16
        $region24: #{highway_forward_packed.1} parent=19 // pred_fallthru
          _
        // Predicated region
        $region25: #{highway_forward_packed.1} parent=19 // pred_check
          %p187 = pneg %p98
        $region26: #{highway_forward_packed.1} parent=19 // pred_check_branch
          %189 = sbr.rel (%p187) target = $region28
        $region27: #{highway_forward_packed.1} parent=19 // pred_region
          %s190 = sand.u32 %s14, 1
          %s191 = scalar_lea.sflag [#allocation7], %s190
          %s192 = sand.u32 %s88, 1
          %s193 = smul.addr %s192, 4
          %s194 = scalar_lea.vmem [#allocation8], %s193
          %s196 = ssub.s32 64, 64
          %197 = vsyncadd %s191, %s196
          %s198 = smul.addr %s22, 4
          %s199 = smul.addr %s198, 16
          %s200 = scalar_lea.hbm %s2, %s199
          %s202 = sshll.u32 %s194, 4
          %s203 = int_to_ptr.vmem [resolvable:$true] %s202
          %205 = dma.hbm_to_vmem [thread:$0]  %s200, 64, %s203, %s191
        $region28: #{highway_forward_packed.1} parent=19 // pred_fallthru
          _
      $region20: #{highway_forward_packed.1} parent=5 // pred_fallthru
        _
      %p206 = scmp.le.s32.totalorder 1, %s14
      %p207 = scmp.lt.s32.totalorder %s14, 4
      %p208 = pnand %p206, %p207
      %p209 = pneg %p208
      // Predicated region
      $region29: #{highway_forward_packed.1} parent=5 // pred_check
        _
      $region30: #{highway_forward_packed.1} parent=5 // pred_check_branch
        %211 = sbr.rel (%p208) target = $region32
      $region31: #{highway_forward_packed.1} parent=5 // pred_region
        %s212 = ssub.s32 %s14, 1
        // Predicated region
        $region33: #{highway_forward_packed.1} parent=31 // pred_check
          %p213 = pneg %p52
        $region34: #{highway_forward_packed.1} parent=31 // pred_check_branch
          %215 = sbr.rel (%p213) target = $region36
        $region35: #{highway_forward_packed.1} parent=31 // pred_region
          %216 = dma.done [#allocation4], 4096
        $region36: #{highway_forward_packed.1} parent=31 // pred_fallthru
          _
        %s217 = sand.u32 %s19, 1
        %s218 = scalar_lea.sflag [#allocation7], %s217
        %s219 = sand.u32 %s65, 1
        %s220 = smul.addr %s219, 512
        %s221 = scalar_lea.vmem [#allocation6], %s220
        // Predicated region
        $region37: #{highway_forward_packed.1} parent=31 // pred_check
          %p222 = pneg %p78
        $region38: #{highway_forward_packed.1} parent=31 // pred_check_branch
          %224 = sbr.rel (%p222) target = $region40
        $region39: #{highway_forward_packed.1} parent=31 // pred_region
          %225 = dma.done %s218, 8192
        $region40: #{highway_forward_packed.1} parent=31 // pred_fallthru
          _
        %s226 = sand.u32 %s19, 1
        %s227 = scalar_lea.sflag [#allocation7], %s226
        %s228 = sand.u32 %s91, 1
        %s229 = smul.addr %s228, 4
        %s230 = scalar_lea.vmem [#allocation8], %s229
        // Predicated region
        $region41: #{highway_forward_packed.1} parent=31 // pred_check
          %p231 = pneg %p104
        $region42: #{highway_forward_packed.1} parent=31 // pred_check_branch
          %233 = sbr.rel (%p231) target = $region44
        $region43: #{highway_forward_packed.1} parent=31 // pred_region
          %234 = dma.done %s227, 64
        $region44: #{highway_forward_packed.1} parent=31 // pred_fallthru
          _
        %p235 = pneg %p52
        %p236 = pneg %p49
        %s237 = sand.u32 %s19, 1
        %s238 = scalar_lea.sflag [#allocation7], %s237
        %s239 = sand.u32 %s65, 1
        %s240 = smul.addr %s239, 512
        %s241 = scalar_lea.vmem [#allocation6], %s240
        %p242 = pneg %p78
        %p243 = pneg %p75
        %s244 = sand.u32 %s19, 1
        %s245 = scalar_lea.sflag [#allocation7], %s244
        %s246 = sand.u32 %s91, 1
        %s247 = smul.addr %s246, 4
        %s248 = scalar_lea.vmem [#allocation8], %s247
        %p249 = pneg %p104
        %p250 = pneg %p101
        %p251 = pneg %p130
        %p252 = pneg %p127
        %s253 = smul.u32 16, %s23
        %s254 = smul.u32 16, %s23
        %p255 = scmp.eq.s32.totalorder %s24, 0
        // Predicated region
        $region45: #{highway_forward_packed.1} parent=31 // pred_check
          %p256 = pneg %p255
        $region46: #{highway_forward_packed.1} parent=31 // pred_check_branch
          %258 = sbr.rel (%p256) target = $region48
        $region47: #{highway_forward_packed.1} parent=31 // pred_region
          %v259 = vld [vmem:[#allocation3] sm:$0xff]
          %v260 = vld [vmem:[#allocation3 + $0x8] sm:$0xff]
          %v261 = vld [vmem:[#allocation3 + $0x10] sm:$0xff]
          %v262 = vld [vmem:[#allocation3 + $0x18] sm:$0xff]
          %v263 = vld [vmem:[#allocation3 + $0x20] sm:$0xff]
          %v264 = vld [vmem:[#allocation3 + $0x28] sm:$0xff]
          %v265 = vld [vmem:[#allocation3 + $0x30] sm:$0xff]
          %v266 = vld [vmem:[#allocation3 + $0x38] sm:$0xff]
          %v267 = vld [vmem:[#allocation3 + $0x40] sm:$0xff]
          %v268 = vld [vmem:[#allocation3 + $0x48] sm:$0xff]
          %v269 = vld [vmem:[#allocation3 + $0x50] sm:$0xff]
          %v270 = vld [vmem:[#allocation3 + $0x58] sm:$0xff]
          %v271 = vld [vmem:[#allocation3 + $0x60] sm:$0xff]
          %v272 = vld [vmem:[#allocation3 + $0x68] sm:$0xff]
          %v273 = vld [vmem:[#allocation3 + $0x70] sm:$0xff]
          %v274 = vld [vmem:[#allocation3 + $0x78] sm:$0xff]
          %v275 = vld [vmem:[#allocation3 + $0x80] sm:$0xff]
          %v276 = vld [vmem:[#allocation3 + $0x88] sm:$0xff]
          %v277 = vld [vmem:[#allocation3 + $0x90] sm:$0xff]
          %v278 = vld [vmem:[#allocation3 + $0x98] sm:$0xff]
          %v279 = vld [vmem:[#allocation3 + $0xa0] sm:$0xff]
          %v280 = vld [vmem:[#allocation3 + $0xa8] sm:$0xff]
          %v281 = vld [vmem:[#allocation3 + $0xb0] sm:$0xff]
          %v282 = vld [vmem:[#allocation3 + $0xb8] sm:$0xff]
          %v283 = vld [vmem:[#allocation3 + $0xc0] sm:$0xff]
          %v284 = vld [vmem:[#allocation3 + $0xc8] sm:$0xff]
          %v285 = vld [vmem:[#allocation3 + $0xd0] sm:$0xff]
          %v286 = vld [vmem:[#allocation3 + $0xd8] sm:$0xff]
          %v287 = vld [vmem:[#allocation3 + $0xe0] sm:$0xff]
          %v288 = vld [vmem:[#allocation3 + $0xe8] sm:$0xff]
          %v289 = vld [vmem:[#allocation3 + $0xf0] sm:$0xff]
          %v290 = vld [vmem:[#allocation3 + $0xf8] sm:$0xff]
          %291 = vst [vmem:[#allocation2] sm:$0xff] %v259
          %292 = vst [vmem:[#allocation2 + $0x8] sm:$0xff] %v260
          %293 = vst [vmem:[#allocation2 + $0x10] sm:$0xff] %v261
          %294 = vst [vmem:[#allocation2 + $0x18] sm:$0xff] %v262
          %295 = vst [vmem:[#allocation2 + $0x20] sm:$0xff] %v263
          %296 = vst [vmem:[#allocation2 + $0x28] sm:$0xff] %v264
          %297 = vst [vmem:[#allocation2 + $0x30] sm:$0xff] %v265
          %298 = vst [vmem:[#allocation2 + $0x38] sm:$0xff] %v266
          %299 = vst [vmem:[#allocation2 + $0x40] sm:$0xff] %v267
          %300 = vst [vmem:[#allocation2 + $0x48] sm:$0xff] %v268
          %301 = vst [vmem:[#allocation2 + $0x50] sm:$0xff] %v269
          %302 = vst [vmem:[#allocation2 + $0x58] sm:$0xff] %v270
          %303 = vst [vmem:[#allocation2 + $0x60] sm:$0xff] %v271
          %304 = vst [vmem:[#allocation2 + $0x68] sm:$0xff] %v272
          %305 = vst [vmem:[#allocation2 + $0x70] sm:$0xff] %v273
          %306 = vst [vmem:[#allocation2 + $0x78] sm:$0xff] %v274
          %307 = vst [vmem:[#allocation2 + $0x80] sm:$0xff] %v275
          %308 = vst [vmem:[#allocation2 + $0x88] sm:$0xff] %v276
          %309 = vst [vmem:[#allocation2 + $0x90] sm:$0xff] %v277
          %310 = vst [vmem:[#allocation2 + $0x98] sm:$0xff] %v278
          %311 = vst [vmem:[#allocation2 + $0xa0] sm:$0xff] %v279
          %312 = vst [vmem:[#allocation2 + $0xa8] sm:$0xff] %v280
          %313 = vst [vmem:[#allocation2 + $0xb0] sm:$0xff] %v281
          %314 = vst [vmem:[#allocation2 + $0xb8] sm:$0xff] %v282
          %315 = vst [vmem:[#allocation2 + $0xc0] sm:$0xff] %v283
          %316 = vst [vmem:[#allocation2 + $0xc8] sm:$0xff] %v284
          %317 = vst [vmem:[#allocation2 + $0xd0] sm:$0xff] %v285
          %318 = vst [vmem:[#allocation2 + $0xd8] sm:$0xff] %v286
          %319 = vst [vmem:[#allocation2 + $0xe0] sm:$0xff] %v287
          %320 = vst [vmem:[#allocation2 + $0xe8] sm:$0xff] %v288
          %321 = vst [vmem:[#allocation2 + $0xf0] sm:$0xff] %v289
          %322 = vst [vmem:[#allocation2 + $0xf8] sm:$0xff] %v290
        $region48: #{highway_forward_packed.1} parent=31 // pred_fallthru
          _
        %v323 = vld [vmem:[#allocation2] sm:$0xff]
        %v324 = vld [vmem:[#allocation2 + $0x8] sm:$0xff]
        %v325 = vld [vmem:[#allocation2 + $0x10] sm:$0xff]
        %v326 = vld [vmem:[#allocation2 + $0x18] sm:$0xff]
        %v327 = vld [vmem:[#allocation2 + $0x20] sm:$0xff]
        %v328 = vld [vmem:[#allocation2 + $0x28] sm:$0xff]
        %v329 = vld [vmem:[#allocation2 + $0x30] sm:$0xff]
        %v330 = vld [vmem:[#allocation2 + $0x38] sm:$0xff]
        %v331 = vld [vmem:[#allocation2 + $0x40] sm:$0xff]
        %v332 = vld [vmem:[#allocation2 + $0x48] sm:$0xff]
        %v333 = vld [vmem:[#allocation2 + $0x50] sm:$0xff]
        %v334 = vld [vmem:[#allocation2 + $0x58] sm:$0xff]
        %v335 = vld [vmem:[#allocation2 + $0x60] sm:$0xff]
        %v336 = vld [vmem:[#allocation2 + $0x68] sm:$0xff]
        %v337 = vld [vmem:[#allocation2 + $0x70] sm:$0xff]
        %v338 = vld [vmem:[#allocation2 + $0x78] sm:$0xff]
        %v339 = vld [vmem:[#allocation2 + $0x80] sm:$0xff]
        %v340 = vld [vmem:[#allocation2 + $0x88] sm:$0xff]
        %v341 = vld [vmem:[#allocation2 + $0x90] sm:$0xff]
        %v342 = vld [vmem:[#allocation2 + $0x98] sm:$0xff]
        %v343 = vld [vmem:[#allocation2 + $0xa0] sm:$0xff]
        %v344 = vld [vmem:[#allocation2 + $0xa8] sm:$0xff]
        %v345 = vld [vmem:[#allocation2 + $0xb0] sm:$0xff]
        %v346 = vld [vmem:[#allocation2 + $0xb8] sm:$0xff]
        %v347 = vld [vmem:[#allocation2 + $0xc0] sm:$0xff]
        %v348 = vld [vmem:[#allocation2 + $0xc8] sm:$0xff]
        %v349 = vld [vmem:[#allocation2 + $0xd0] sm:$0xff]
        %v350 = vld [vmem:[#allocation2 + $0xd8] sm:$0xff]
        %v351 = vld [vmem:[#allocation2 + $0xe0] sm:$0xff]
        %v352 = vld [vmem:[#allocation2 + $0xe8] sm:$0xff]
        %v353 = vld [vmem:[#allocation2 + $0xf0] sm:$0xff]
        %v354 = vld [vmem:[#allocation2 + $0xf8] sm:$0xff]
        %v355 = vpack.c.bf16 %v325, %v323
        %v356 = vpack.c.bf16 %v326, %v324
        %v357 = vpack.c.bf16 %v329, %v327
        %v358 = vpack.c.bf16 %v330, %v328
        %v359 = vpack.c.bf16 %v333, %v331
        %v360 = vpack.c.bf16 %v334, %v332
        %v361 = vpack.c.bf16 %v337, %v335
        %v362 = vpack.c.bf16 %v338, %v336
        %v363 = vpack.c.bf16 %v341, %v339
        %v364 = vpack.c.bf16 %v342, %v340
        %v365 = vpack.c.bf16 %v345, %v343
        %v366 = vpack.c.bf16 %v346, %v344
        %v367 = vpack.c.bf16 %v349, %v347
        %v368 = vpack.c.bf16 %v350, %v348
        %v369 = vpack.c.bf16 %v353, %v351
        %v370 = vpack.c.bf16 %v354, %v352
        %v371 = vld [vmem:[%s221] sm:$0xff]
        %v372 = vld [vmem:[%s221 + $0x8] sm:$0xff]
        %v373 = vld [vmem:[%s221 + $0x10] sm:$0xff]
        %v374 = vld [vmem:[%s221 + $0x18] sm:$0xff]
        %v375 = vld [vmem:[%s221 + $0x20] sm:$0xff]
        %v376 = vld [vmem:[%s221 + $0x28] sm:$0xff]
        %v377 = vld [vmem:[%s221 + $0x30] sm:$0xff]
        %v378 = vld [vmem:[%s221 + $0x38] sm:$0xff]
        %v379 = vld [vmem:[%s221 + $0x40] sm:$0xff]
        %v380 = vld [vmem:[%s221 + $0x48] sm:$0xff]
        %v381 = vld [vmem:[%s221 + $0x50] sm:$0xff]
        %v382 = vld [vmem:[%s221 + $0x58] sm:$0xff]
        %v383 = vld [vmem:[%s221 + $0x60] sm:$0xff]
        %v384 = vld [vmem:[%s221 + $0x68] sm:$0xff]
        %v385 = vld [vmem:[%s221 + $0x70] sm:$0xff]
        %v386 = vld [vmem:[%s221 + $0x78] sm:$0xff]
        %v387 = vld [vmem:[%s221 + $0x80] sm:$0xff]
        %v388 = vld [vmem:[%s221 + $0x88] sm:$0xff]
        %v389 = vld [vmem:[%s221 + $0x90] sm:$0xff]
        %v390 = vld [vmem:[%s221 + $0x98] sm:$0xff]
        %v391 = vld [vmem:[%s221 + $0xa0] sm:$0xff]
        %v392 = vld [vmem:[%s221 + $0xa8] sm:$0xff]
        %v393 = vld [vmem:[%s221 + $0xb0] sm:$0xff]
        %v394 = vld [vmem:[%s221 + $0xb8] sm:$0xff]
        %v395 = vld [vmem:[%s221 + $0xc0] sm:$0xff]
        %v396 = vld [vmem:[%s221 + $0xc8] sm:$0xff]
        %v397 = vld [vmem:[%s221 + $0xd0] sm:$0xff]
        %v398 = vld [vmem:[%s221 + $0xd8] sm:$0xff]
        %v399 = vld [vmem:[%s221 + $0xe0] sm:$0xff]
        %v400 = vld [vmem:[%s221 + $0xe8] sm:$0xff]
        %v401 = vld [vmem:[%s221 + $0xf0] sm:$0xff]
        %v402 = vld [vmem:[%s221 + $0xf8] sm:$0xff]
        %v403 = vld [vmem:[%s221 + $0x100] sm:$0xff]
        %v404 = vld [vmem:[%s221 + $0x108] sm:$0xff]
        %v405 = vld [vmem:[%s221 + $0x110] sm:$0xff]
        %v406 = vld [vmem:[%s221 + $0x118] sm:$0xff]
        %v407 = vld [vmem:[%s221 + $0x120] sm:$0xff]
        %v408 = vld [vmem:[%s221 + $0x128] sm:$0xff]
        %v409 = vld [vmem:[%s221 + $0x130] sm:$0xff]
        %v410 = vld [vmem:[%s221 + $0x138] sm:$0xff]
        %v411 = vld [vmem:[%s221 + $0x140] sm:$0xff]
        %v412 = vld [vmem:[%s221 + $0x148] sm:$0xff]
        %v413 = vld [vmem:[%s221 + $0x150] sm:$0xff]
        %v414 = vld [vmem:[%s221 + $0x158] sm:$0xff]
        %v415 = vld [vmem:[%s221 + $0x160] sm:$0xff]
        %v416 = vld [vmem:[%s221 + $0x168] sm:$0xff]
        %v417 = vld [vmem:[%s221 + $0x170] sm:$0xff]
        %v418 = vld [vmem:[%s221 + $0x178] sm:$0xff]
        %v419 = vld [vmem:[%s221 + $0x180] sm:$0xff]
        %v420 = vld [vmem:[%s221 + $0x188] sm:$0xff]
        %v421 = vld [vmem:[%s221 + $0x190] sm:$0xff]
        %v422 = vld [vmem:[%s221 + $0x198] sm:$0xff]
        %v423 = vld [vmem:[%s221 + $0x1a0] sm:$0xff]
        %v424 = vld [vmem:[%s221 + $0x1a8] sm:$0xff]
        %v425 = vld [vmem:[%s221 + $0x1b0] sm:$0xff]
        %v426 = vld [vmem:[%s221 + $0x1b8] sm:$0xff]
        %v427 = vld [vmem:[%s221 + $0x1c0] sm:$0xff]
        %v428 = vld [vmem:[%s221 + $0x1c8] sm:$0xff]
        %v429 = vld [vmem:[%s221 + $0x1d0] sm:$0xff]
        %v430 = vld [vmem:[%s221 + $0x1d8] sm:$0xff]
        %v431 = vld [vmem:[%s221 + $0x1e0] sm:$0xff]
        %v432 = vld [vmem:[%s221 + $0x1e8] sm:$0xff]
        %v433 = vld [vmem:[%s221 + $0x1f0] sm:$0xff]
        %v434 = vld [vmem:[%s221 + $0x1f8] sm:$0xff]
        %v435 = vld [vmem:[%s230] sm:$0xf]
        %v437 = vlaneseq
        %v438 = vshrl.u32 %v437, 7
        %v439 = vsub.s32 0, %v438
        %v440 = vrot.slane %v435, %v439
        %v441 = vlaneseq
        %v442 = vshrl.u32 %v441, 7
        %v443 = vsub.s32 1, %v442
        %v444 = vrot.slane %v435, %v443
        %v445 = vlaneseq
        %v446 = vshrl.u32 %v445, 7
        %v447 = vsub.s32 2, %v446
        %v448 = vrot.slane %v435, %v447
        %v449 = vlaneseq
        %v450 = vshrl.u32 %v449, 7
        %v451 = vsub.s32 3, %v450
        %v452 = vrot.slane %v435, %v451
        %v521 = vunpack.c.l.b16 %v371
        %v522 = vunpack.c.h.b16 %v371
        %v523 = vunpack.c.l.b16 %v372
        %v524 = vunpack.c.h.b16 %v372
        %v525 = vunpack.c.l.b16 %v373
        %v526 = vunpack.c.h.b16 %v373
        %v527 = vunpack.c.l.b16 %v374
        %v528 = vunpack.c.h.b16 %v374
        %v529 = vunpack.c.l.b16 %v375
        %v530 = vunpack.c.h.b16 %v375
        %v531 = vunpack.c.l.b16 %v376
        %v532 = vunpack.c.h.b16 %v376
        %v533 = vunpack.c.l.b16 %v377
        %v534 = vunpack.c.h.b16 %v377
        %v535 = vunpack.c.l.b16 %v378
        %v536 = vunpack.c.h.b16 %v378
        %v537 = vunpack.c.l.b16 %v379
        %v538 = vunpack.c.h.b16 %v379
        %v539 = vunpack.c.l.b16 %v380
        %v540 = vunpack.c.h.b16 %v380
        %v541 = vunpack.c.l.b16 %v381
        %v542 = vunpack.c.h.b16 %v381
        %v543 = vunpack.c.l.b16 %v382
        %v544 = vunpack.c.h.b16 %v382
        %v545 = vunpack.c.l.b16 %v383
        %v546 = vunpack.c.h.b16 %v383
        %v547 = vunpack.c.l.b16 %v384
        %v548 = vunpack.c.h.b16 %v384
        %v549 = vunpack.c.l.b16 %v385
        %v550 = vunpack.c.h.b16 %v385
        %v551 = vunpack.c.l.b16 %v386
        %v552 = vunpack.c.h.b16 %v386
        %v553 = vunpack.c.l.b16 %v387
        %v554 = vunpack.c.h.b16 %v387
        %v555 = vunpack.c.l.b16 %v388
        %v556 = vunpack.c.h.b16 %v388
        %v557 = vunpack.c.l.b16 %v389
        %v558 = vunpack.c.h.b16 %v389
        %v559 = vunpack.c.l.b16 %v390
        %v560 = vunpack.c.h.b16 %v390
        %v561 = vunpack.c.l.b16 %v391
        %v562 = vunpack.c.h.b16 %v391
        %v563 = vunpack.c.l.b16 %v392
        %v564 = vunpack.c.h.b16 %v392
        %v565 = vunpack.c.l.b16 %v393
        %v566 = vunpack.c.h.b16 %v393
        %v567 = vunpack.c.l.b16 %v394
        %v568 = vunpack.c.h.b16 %v394
        %v569 = vunpack.c.l.b16 %v395
        %v570 = vunpack.c.h.b16 %v395
        %v571 = vunpack.c.l.b16 %v396
        %v572 = vunpack.c.h.b16 %v396
        %v573 = vunpack.c.l.b16 %v397
        %v574 = vunpack.c.h.b16 %v397
        %v575 = vunpack.c.l.b16 %v398
        %v576 = vunpack.c.h.b16 %v398
        %v577 = vunpack.c.l.b16 %v399
        %v578 = vunpack.c.h.b16 %v399
        %v579 = vunpack.c.l.b16 %v400
        %v580 = vunpack.c.h.b16 %v400
        %v581 = vunpack.c.l.b16 %v401
        %v582 = vunpack.c.h.b16 %v401
        %v583 = vunpack.c.l.b16 %v402
        %v584 = vunpack.c.h.b16 %v402
        %v585 = vunpack.c.l.b16 %v403
        %v586 = vunpack.c.h.b16 %v403
        %v587 = vunpack.c.l.b16 %v404
        %v588 = vunpack.c.h.b16 %v404
        %v589 = vunpack.c.l.b16 %v405
        %v590 = vunpack.c.h.b16 %v405
        %v591 = vunpack.c.l.b16 %v406
        %v592 = vunpack.c.h.b16 %v406
        %v593 = vunpack.c.l.b16 %v407
        %v594 = vunpack.c.h.b16 %v407
        %v595 = vunpack.c.l.b16 %v408
        %v596 = vunpack.c.h.b16 %v408
        %v597 = vunpack.c.l.b16 %v409
        %v598 = vunpack.c.h.b16 %v409
        %v599 = vunpack.c.l.b16 %v410
        %v600 = vunpack.c.h.b16 %v410
        %v601 = vunpack.c.l.b16 %v411
        %v602 = vunpack.c.h.b16 %v411
        %v603 = vunpack.c.l.b16 %v412
        %v604 = vunpack.c.h.b16 %v412
        %v605 = vunpack.c.l.b16 %v413
        %v606 = vunpack.c.h.b16 %v413
        %v607 = vunpack.c.l.b16 %v414
        %v608 = vunpack.c.h.b16 %v414
        %v609 = vunpack.c.l.b16 %v415
        %v610 = vunpack.c.h.b16 %v415
        %v611 = vunpack.c.l.b16 %v416
        %v612 = vunpack.c.h.b16 %v416
        %v613 = vunpack.c.l.b16 %v417
        %v614 = vunpack.c.h.b16 %v417
        %v615 = vunpack.c.l.b16 %v418
        %v616 = vunpack.c.h.b16 %v418
        %v617 = vunpack.c.l.b16 %v419
        %v618 = vunpack.c.h.b16 %v419
        %v619 = vunpack.c.l.b16 %v420
        %v620 = vunpack.c.h.b16 %v420
        %v621 = vunpack.c.l.b16 %v421
        %v622 = vunpack.c.h.b16 %v421
        %v623 = vunpack.c.l.b16 %v422
        %v624 = vunpack.c.h.b16 %v422
        %v625 = vunpack.c.l.b16 %v423
        %v626 = vunpack.c.h.b16 %v423
        %v627 = vunpack.c.l.b16 %v424
        %v628 = vunpack.c.h.b16 %v424
        %v629 = vunpack.c.l.b16 %v425
        %v630 = vunpack.c.h.b16 %v425
        %v631 = vunpack.c.l.b16 %v426
        %v632 = vunpack.c.h.b16 %v426
        %v633 = vunpack.c.l.b16 %v427
        %v634 = vunpack.c.h.b16 %v427
        %v635 = vunpack.c.l.b16 %v428
        %v636 = vunpack.c.h.b16 %v428
        %v637 = vunpack.c.l.b16 %v429
        %v638 = vunpack.c.h.b16 %v429
        %v639 = vunpack.c.l.b16 %v430
        %v640 = vunpack.c.h.b16 %v430
        %v641 = vunpack.c.l.b16 %v431
        %v642 = vunpack.c.h.b16 %v431
        %v643 = vunpack.c.l.b16 %v432
        %v644 = vunpack.c.h.b16 %v432
        %v645 = vunpack.c.l.b16 %v433
        %v646 = vunpack.c.h.b16 %v433
        %v647 = vunpack.c.l.b16 %v434
        %v648 = vunpack.c.h.b16 %v434
        %v649 = vpack.c.b16 %v525, %v521
        %v650 = vpack.c.b16 %v526, %v522
        %v651 = vpack.c.b16 %v527, %v523
        %v652 = vpack.c.b16 %v528, %v524
        %v653 = vpack.c.b16 %v533, %v529
        %v654 = vpack.c.b16 %v534, %v530
        %v655 = vpack.c.b16 %v535, %v531
        %v656 = vpack.c.b16 %v536, %v532
        %v657 = vpack.c.b16 %v541, %v537
        %v658 = vpack.c.b16 %v542, %v538
        %v659 = vpack.c.b16 %v543, %v539
        %v660 = vpack.c.b16 %v544, %v540
        %v661 = vpack.c.b16 %v549, %v545
        %v662 = vpack.c.b16 %v550, %v546
        %v663 = vpack.c.b16 %v551, %v547
        %v664 = vpack.c.b16 %v552, %v548
        %v665 = vpack.c.b16 %v557, %v553
        %v666 = vpack.c.b16 %v558, %v554
        %v667 = vpack.c.b16 %v559, %v555
        %v668 = vpack.c.b16 %v560, %v556
        %v669 = vpack.c.b16 %v565, %v561
        %v670 = vpack.c.b16 %v566, %v562
        %v671 = vpack.c.b16 %v567, %v563
        %v672 = vpack.c.b16 %v568, %v564
        %v673 = vpack.c.b16 %v573, %v569
        %v674 = vpack.c.b16 %v574, %v570
        %v675 = vpack.c.b16 %v575, %v571
        %v676 = vpack.c.b16 %v576, %v572
        %v677 = vpack.c.b16 %v581, %v577
        %v678 = vpack.c.b16 %v582, %v578
        %v679 = vpack.c.b16 %v583, %v579
        %v680 = vpack.c.b16 %v584, %v580
        %v681 = vpack.c.b16 %v589, %v585
        %v682 = vpack.c.b16 %v590, %v586
        %v683 = vpack.c.b16 %v591, %v587
        %v684 = vpack.c.b16 %v592, %v588
        %v685 = vpack.c.b16 %v597, %v593
        %v686 = vpack.c.b16 %v598, %v594
        %v687 = vpack.c.b16 %v599, %v595
        %v688 = vpack.c.b16 %v600, %v596
        %v689 = vpack.c.b16 %v605, %v601
        %v690 = vpack.c.b16 %v606, %v602
        %v691 = vpack.c.b16 %v607, %v603
        %v692 = vpack.c.b16 %v608, %v604
        %v693 = vpack.c.b16 %v613, %v609
        %v694 = vpack.c.b16 %v614, %v610
        %v695 = vpack.c.b16 %v615, %v611
        %v696 = vpack.c.b16 %v616, %v612
        %v697 = vpack.c.b16 %v621, %v617
        %v698 = vpack.c.b16 %v622, %v618
        %v699 = vpack.c.b16 %v623, %v619
        %v700 = vpack.c.b16 %v624, %v620
        %v701 = vpack.c.b16 %v629, %v625
        %v702 = vpack.c.b16 %v630, %v626
        %v703 = vpack.c.b16 %v631, %v627
        %v704 = vpack.c.b16 %v632, %v628
        %v705 = vpack.c.b16 %v637, %v633
        %v706 = vpack.c.b16 %v638, %v634
        %v707 = vpack.c.b16 %v639, %v635
        %v708 = vpack.c.b16 %v640, %v636
        %v709 = vpack.c.b16 %v645, %v641
        %v710 = vpack.c.b16 %v646, %v642
        %v711 = vpack.c.b16 %v647, %v643
        %v712 = vpack.c.b16 %v648, %v644
        %777 = vmatprep.subr.bf16.mxu0 %v650
        %778 = vmatpush1.bf16.msra.mxu0 %v649
        %779 = vmatprep.subr.bf16.mxu0 %v654
        %780 = vmatpush1.bf16.msra.mxu0 %v653
        %781 = vmatprep.subr.bf16.mxu0 %v658
        %782 = vmatpush1.bf16.msra.mxu0 %v657
        %783 = vmatprep.subr.bf16.mxu0 %v662
        %784 = vmatpush1.bf16.msra.mxu0 %v661
        %785 = vmatprep.subr.bf16.mxu0 %v666
        %786 = vmatpush1.bf16.msra.mxu0 %v665
        %787 = vmatprep.subr.bf16.mxu0 %v670
        %788 = vmatpush1.bf16.msra.mxu0 %v669
        %789 = vmatprep.subr.bf16.mxu0 %v674
        %790 = vmatpush1.bf16.msra.mxu0 %v673
        %791 = vmatprep.subr.bf16.mxu0 %v678
        %792 = vmatpush1.bf16.msra.mxu0 %v677
        %793 = vmatprep.subr.bf16.mxu0 %v682
        %794 = vmatpush1.bf16.msra.mxu0 %v681
        %795 = vmatprep.subr.bf16.mxu0 %v686
        %796 = vmatpush1.bf16.msra.mxu0 %v685
        %797 = vmatprep.subr.bf16.mxu0 %v690
        %798 = vmatpush1.bf16.msra.mxu0 %v689
        %799 = vmatprep.subr.bf16.mxu0 %v694
        %800 = vmatpush1.bf16.msra.mxu0 %v693
        %801 = vmatprep.subr.bf16.mxu0 %v698
        %802 = vmatpush1.bf16.msra.mxu0 %v697
        %803 = vmatprep.subr.bf16.mxu0 %v702
        %804 = vmatpush1.bf16.msra.mxu0 %v701
        %805 = vmatprep.subr.bf16.mxu0 %v706
        %806 = vmatpush1.bf16.msra.mxu0 %v705
        %807 = vmatprep.subr.bf16.mxu0 %v710
        %808 = vmatpush1.bf16.msra.mxu0 %v709
        %809 = vmatprep.mubr.bf16.mxu0 %v356
        %810 = vmatmul.mubr.bf16.gmra.mrb[0].mxu0 %v355
        %v811 = vpop.f32.mrb[0].mxu0
        %v812 = vadd.f32 %v440, %v811
        %v813 = vpop.f32.mrb[0].mxu0
        %v814 = vadd.f32 %v444, %v813
        %v815 = vpop.f32.mrb[0].mxu0
        %v816 = vadd.f32 %v440, %v815
        %v817 = vpop.f32.mrb[0].mxu0
        %v818 = vadd.f32 %v444, %v817
        %819 = vmatprep.mubr.bf16.mxu0 %v358
        %820 = vmatmul.mubr.bf16.gmra.mrb[0].mxu0 %v357
        %v821 = vpop.f32.mrb[0].mxu0
        %v822 = vadd.f32 %v440, %v821
        %v823 = vpop.f32.mrb[0].mxu0
        %v824 = vadd.f32 %v444, %v823
        %v825 = vpop.f32.mrb[0].mxu0
        %v826 = vadd.f32 %v440, %v825
        %v827 = vpop.f32.mrb[0].mxu0
        %v828 = vadd.f32 %v444, %v827
        %829 = vmatprep.mubr.bf16.mxu0 %v360
        %830 = vmatmul.mubr.bf16.gmra.mrb[0].mxu0 %v359
        %v831 = vpop.f32.mrb[0].mxu0
        %v832 = vadd.f32 %v440, %v831
        %v833 = vpop.f32.mrb[0].mxu0
        %v834 = vadd.f32 %v444, %v833
        %v835 = vpop.f32.mrb[0].mxu0
        %v836 = vadd.f32 %v440, %v835
        %v837 = vpop.f32.mrb[0].mxu0
        %v838 = vadd.f32 %v444, %v837
        %839 = vmatprep.mubr.bf16.mxu0 %v362
        %840 = vmatmul.mubr.bf16.gmra.mrb[0].mxu0 %v361
        %v841 = vpop.f32.mrb[0].mxu0
        %v842 = vadd.f32 %v440, %v841
        %v843 = vpop.f32.mrb[0].mxu0
        %v844 = vadd.f32 %v444, %v843
        %v845 = vpop.f32.mrb[0].mxu0
        %v846 = vadd.f32 %v440, %v845
        %v847 = vpop.f32.mrb[0].mxu0
        %v848 = vadd.f32 %v444, %v847
        %849 = vmatprep.mubr.bf16.mxu0 %v364
        %850 = vmatmul.mubr.bf16.gmra.mrb[0].mxu0 %v363
        %v851 = vpop.f32.mrb[0].mxu0
        %v852 = vadd.f32 %v440, %v851
        %v853 = vpop.f32.mrb[0].mxu0
        %v854 = vadd.f32 %v444, %v853
        %v855 = vpop.f32.mrb[0].mxu0
        %v856 = vadd.f32 %v440, %v855
        %v857 = vpop.f32.mrb[0].mxu0
        %v858 = vadd.f32 %v444, %v857
        %859 = vmatprep.mubr.bf16.mxu0 %v366
        %860 = vmatmul.mubr.bf16.gmra.mrb[0].mxu0 %v365
        %v861 = vpop.f32.mrb[0].mxu0
        %v862 = vadd.f32 %v440, %v861
        %v863 = vpop.f32.mrb[0].mxu0
        %v864 = vadd.f32 %v444, %v863
        %v865 = vpop.f32.mrb[0].mxu0
        %v866 = vadd.f32 %v440, %v865
        %v867 = vpop.f32.mrb[0].mxu0
        %v868 = vadd.f32 %v444, %v867
        %869 = vmatprep.mubr.bf16.mxu0 %v368
        %870 = vmatmul.mubr.bf16.gmra.mrb[0].mxu0 %v367
        %v871 = vpop.f32.mrb[0].mxu0
        %v872 = vadd.f32 %v440, %v871
        %v873 = vpop.f32.mrb[0].mxu0
        %v874 = vadd.f32 %v444, %v873
        %v875 = vpop.f32.mrb[0].mxu0
        %v876 = vadd.f32 %v440, %v875
        %v877 = vpop.f32.mrb[0].mxu0
        %v878 = vadd.f32 %v444, %v877
        %879 = vmatprep.mubr.bf16.mxu0 %v370
        %880 = vmatmul.mubr.bf16.gmra.mrb[0].mxu0 %v369
        %v881 = vpop.f32.mrb[0].mxu0
        %v882 = vadd.f32 %v440, %v881
        %v883 = vpop.f32.mrb[0].mxu0
        %v884 = vadd.f32 %v444, %v883
        %v885 = vpop.f32.mrb[0].mxu0
        %v886 = vadd.f32 %v440, %v885
        %v887 = vpop.f32.mrb[0].mxu0
        %v888 = vadd.f32 %v444, %v887
        %889 = vdwg.mxu0
        %890 = vmatprep.subr.bf16.mxu0 %v652
        %891 = vmatpush1.bf16.msra.mxu0 %v651
        %892 = vmatprep.subr.bf16.mxu0 %v656
        %893 = vmatpush1.bf16.msra.mxu0 %v655
        %894 = vmatprep.subr.bf16.mxu0 %v660
        %895 = vmatpush1.bf16.msra.mxu0 %v659
        %896 = vmatprep.subr.bf16.mxu0 %v664
        %897 = vmatpush1.bf16.msra.mxu0 %v663
        %898 = vmatprep.subr.bf16.mxu0 %v668
        %899 = vmatpush1.bf16.msra.mxu0 %v667
        %900 = vmatprep.subr.bf16.mxu0 %v672
        %901 = vmatpush1.bf16.msra.mxu0 %v671
        %902 = vmatprep.subr.bf16.mxu0 %v676
        %903 = vmatpush1.bf16.msra.mxu0 %v675
        %904 = vmatprep.subr.bf16.mxu0 %v680
        %905 = vmatpush1.bf16.msra.mxu0 %v679
        %906 = vmatprep.subr.bf16.mxu0 %v684
        %907 = vmatpush1.bf16.msra.mxu0 %v683
        %908 = vmatprep.subr.bf16.mxu0 %v688
        %909 = vmatpush1.bf16.msra.mxu0 %v687
        %910 = vmatprep.subr.bf16.mxu0 %v692
        %911 = vmatpush1.bf16.msra.mxu0 %v691
        %912 = vmatprep.subr.bf16.mxu0 %v696
        %913 = vmatpush1.bf16.msra.mxu0 %v695
        %914 = vmatprep.subr.bf16.mxu0 %v700
        %915 = vmatpush1.bf16.msra.mxu0 %v699
        %916 = vmatprep.subr.bf16.mxu0 %v704
        %917 = vmatpush1.bf16.msra.mxu0 %v703
        %918 = vmatprep.subr.bf16.mxu0 %v708
        %919 = vmatpush1.bf16.msra.mxu0 %v707
        %920 = vmatprep.subr.bf16.mxu0 %v712
        %921 = vmatpush1.bf16.msra.mxu0 %v711
        %922 = vmatprep.mubr.bf16.mxu0 %v356
        %923 = vmatmul.mubr.bf16.gmra.mrb[0].mxu0 %v355
        %v924 = vpop.f32.mrb[0].mxu0
        %v925 = vadd.f32 %v448, %v924
        %v926 = vpop.f32.mrb[0].mxu0
        %v927 = vadd.f32 %v452, %v926
        %v928 = vpop.f32.mrb[0].mxu0
        %v929 = vadd.f32 %v448, %v928
        %v930 = vpop.f32.mrb[0].mxu0
        %v931 = vadd.f32 %v452, %v930
        %932 = vmatprep.mubr.bf16.mxu0 %v358
        %933 = vmatmul.mubr.bf16.gmra.mrb[0].mxu0 %v357
        %v934 = vpop.f32.mrb[0].mxu0
        %v935 = vadd.f32 %v448, %v934
        %v936 = vpop.f32.mrb[0].mxu0
        %v937 = vadd.f32 %v452, %v936
        %v938 = vpop.f32.mrb[0].mxu0
        %v939 = vadd.f32 %v448, %v938
        %v940 = vpop.f32.mrb[0].mxu0
        %v941 = vadd.f32 %v452, %v940
        %942 = vmatprep.mubr.bf16.mxu0 %v360
        %943 = vmatmul.mubr.bf16.gmra.mrb[0].mxu0 %v359
        %v944 = vpop.f32.mrb[0].mxu0
        %v945 = vadd.f32 %v448, %v944
        %v946 = vpop.f32.mrb[0].mxu0
        %v947 = vadd.f32 %v452, %v946
        %v948 = vpop.f32.mrb[0].mxu0
        %v949 = vadd.f32 %v448, %v948
        %v950 = vpop.f32.mrb[0].mxu0
        %v951 = vadd.f32 %v452, %v950
        %952 = vmatprep.mubr.bf16.mxu0 %v362
        %953 = vmatmul.mubr.bf16.gmra.mrb[0].mxu0 %v361
        %v954 = vpop.f32.mrb[0].mxu0
        %v955 = vadd.f32 %v448, %v954
        %v956 = vpop.f32.mrb[0].mxu0
        %v957 = vadd.f32 %v452, %v956
        %v958 = vpop.f32.mrb[0].mxu0
        %v959 = vadd.f32 %v448, %v958
        %v960 = vpop.f32.mrb[0].mxu0
        %v961 = vadd.f32 %v452, %v960
        %962 = vmatprep.mubr.bf16.mxu0 %v364
        %963 = vmatmul.mubr.bf16.gmra.mrb[0].mxu0 %v363
        %v964 = vpop.f32.mrb[0].mxu0
        %v965 = vadd.f32 %v448, %v964
        %v966 = vpop.f32.mrb[0].mxu0
        %v967 = vadd.f32 %v452, %v966
        %v968 = vpop.f32.mrb[0].mxu0
        %v969 = vadd.f32 %v448, %v968
        %v970 = vpop.f32.mrb[0].mxu0
        %v971 = vadd.f32 %v452, %v970
        %972 = vmatprep.mubr.bf16.mxu0 %v366
        %973 = vmatmul.mubr.bf16.gmra.mrb[0].mxu0 %v365
        %v974 = vpop.f32.mrb[0].mxu0
        %v975 = vadd.f32 %v448, %v974
        %v976 = vpop.f32.mrb[0].mxu0
        %v977 = vadd.f32 %v452, %v976
        %v978 = vpop.f32.mrb[0].mxu0
        %v979 = vadd.f32 %v448, %v978
        %v980 = vpop.f32.mrb[0].mxu0
        %v981 = vadd.f32 %v452, %v980
        %982 = vmatprep.mubr.bf16.mxu0 %v368
        %983 = vmatmul.mubr.bf16.gmra.mrb[0].mxu0 %v367
        %v984 = vpop.f32.mrb[0].mxu0
        %v985 = vadd.f32 %v448, %v984
        %v986 = vpop.f32.mrb[0].mxu0
        %v987 = vadd.f32 %v452, %v986
        %v988 = vpop.f32.mrb[0].mxu0
        %v989 = vadd.f32 %v448, %v988
        %v990 = vpop.f32.mrb[0].mxu0
        %v991 = vadd.f32 %v452, %v990
        %992 = vmatprep.mubr.bf16.mxu0 %v370
        %993 = vmatmul.mubr.bf16.gmra.mrb[0].mxu0 %v369
        %v994 = vpop.f32.mrb[0].mxu0
        %v995 = vadd.f32 %v448, %v994
        %v996 = vpop.f32.mrb[0].mxu0
        %v997 = vadd.f32 %v452, %v996
        %v998 = vpop.f32.mrb[0].mxu0
        %v999 = vadd.f32 %v448, %v998
        %v1000 = vpop.f32.mrb[0].mxu0
        %v1001 = vadd.f32 %v452, %v1000
        %1002 = vdwg.mxu0
        %v1003 = vmul.f32 %v812, 0.5
        %v1004 = vmul.f32 %v814, 0.5
        %v1005 = vmul.f32 %v816, 0.5
        %v1006 = vmul.f32 %v818, 0.5
        %v1007 = vmul.f32 %v822, 0.5
        %v1008 = vmul.f32 %v824, 0.5
        %v1009 = vmul.f32 %v826, 0.5
        %v1010 = vmul.f32 %v828, 0.5
        %v1011 = vmul.f32 %v832, 0.5
        %v1012 = vmul.f32 %v834, 0.5
        %v1013 = vmul.f32 %v836, 0.5
        %v1014 = vmul.f32 %v838, 0.5
        %v1015 = vmul.f32 %v842, 0.5
        %v1016 = vmul.f32 %v844, 0.5
        %v1017 = vmul.f32 %v846, 0.5
        %v1018 = vmul.f32 %v848, 0.5
        %v1019 = vmul.f32 %v852, 0.5
        %v1020 = vmul.f32 %v854, 0.5
        %v1021 = vmul.f32 %v856, 0.5
        %v1022 = vmul.f32 %v858, 0.5
        %v1023 = vmul.f32 %v862, 0.5
        %v1024 = vmul.f32 %v864, 0.5
        %v1025 = vmul.f32 %v866, 0.5
        %v1026 = vmul.f32 %v868, 0.5
        %v1027 = vmul.f32 %v872, 0.5
        %v1028 = vmul.f32 %v874, 0.5
        %v1029 = vmul.f32 %v876, 0.5
        %v1030 = vmul.f32 %v878, 0.5
        %v1031 = vmul.f32 %v882, 0.5
        %v1032 = vmul.f32 %v884, 0.5
        %v1033 = vmul.f32 %v886, 0.5
        %v1034 = vmul.f32 %v888, 0.5
        %v1035 = vtanh.pop %v1003
        %v1036 = vtanh.pop %v1004
        %v1037 = vtanh.pop %v1005
        %v1038 = vtanh.pop %v1006
        %v1039 = vtanh.pop %v1007
        %v1040 = vtanh.pop %v1008
        %v1041 = vtanh.pop %v1009
        %v1042 = vtanh.pop %v1010
        %v1043 = vtanh.pop %v1011
        %v1044 = vtanh.pop %v1012
        %v1045 = vtanh.pop %v1013
        %v1046 = vtanh.pop %v1014
        %v1047 = vtanh.pop %v1015
        %v1048 = vtanh.pop %v1016
        %v1049 = vtanh.pop %v1017
        %v1050 = vtanh.pop %v1018
        %v1051 = vtanh.pop %v1019
        %v1052 = vtanh.pop %v1020
        %v1053 = vtanh.pop %v1021
        %v1054 = vtanh.pop %v1022
        %v1055 = vtanh.pop %v1023
        %v1056 = vtanh.pop %v1024
        %v1057 = vtanh.pop %v1025
        %v1058 = vtanh.pop %v1026
        %v1059 = vtanh.pop %v1027
        %v1060 = vtanh.pop %v1028
        %v1061 = vtanh.pop %v1029
        %v1062 = vtanh.pop %v1030
        %v1063 = vtanh.pop %v1031
        %v1064 = vtanh.pop %v1032
        %v1065 = vtanh.pop %v1033
        %v1066 = vtanh.pop %v1034
        %v1067 = vadd.f32 %v1035, 1.0
        %v1068 = vadd.f32 %v1036, 1.0
        %v1069 = vadd.f32 %v1037, 1.0
        %v1070 = vadd.f32 %v1038, 1.0
        %v1071 = vadd.f32 %v1039, 1.0
        %v1072 = vadd.f32 %v1040, 1.0
        %v1073 = vadd.f32 %v1041, 1.0
        %v1074 = vadd.f32 %v1042, 1.0
        %v1075 = vadd.f32 %v1043, 1.0
        %v1076 = vadd.f32 %v1044, 1.0
        %v1077 = vadd.f32 %v1045, 1.0
        %v1078 = vadd.f32 %v1046, 1.0
        %v1079 = vadd.f32 %v1047, 1.0
        %v1080 = vadd.f32 %v1048, 1.0
        %v1081 = vadd.f32 %v1049, 1.0
        %v1082 = vadd.f32 %v1050, 1.0
        %v1083 = vadd.f32 %v1051, 1.0
        %v1084 = vadd.f32 %v1052, 1.0
        %v1085 = vadd.f32 %v1053, 1.0
        %v1086 = vadd.f32 %v1054, 1.0
        %v1087 = vadd.f32 %v1055, 1.0
        %v1088 = vadd.f32 %v1056, 1.0
        %v1089 = vadd.f32 %v1057, 1.0
        %v1090 = vadd.f32 %v1058, 1.0
        %v1091 = vadd.f32 %v1059, 1.0
        %v1092 = vadd.f32 %v1060, 1.0
        %v1093 = vadd.f32 %v1061, 1.0
        %v1094 = vadd.f32 %v1062, 1.0
        %v1095 = vadd.f32 %v1063, 1.0
        %v1096 = vadd.f32 %v1064, 1.0
        %v1097 = vadd.f32 %v1065, 1.0
        %v1098 = vadd.f32 %v1066, 1.0
        %v1099 = vmul.f32 %v1067, 0.5
        %v1100 = vmul.f32 %v1068, 0.5
        %v1101 = vmul.f32 %v1069, 0.5
        %v1102 = vmul.f32 %v1070, 0.5
        %v1103 = vmul.f32 %v1071, 0.5
        %v1104 = vmul.f32 %v1072, 0.5
        %v1105 = vmul.f32 %v1073, 0.5
        %v1106 = vmul.f32 %v1074, 0.5
        %v1107 = vmul.f32 %v1075, 0.5
        %v1108 = vmul.f32 %v1076, 0.5
        %v1109 = vmul.f32 %v1077, 0.5
        %v1110 = vmul.f32 %v1078, 0.5
        %v1111 = vmul.f32 %v1079, 0.5
        %v1112 = vmul.f32 %v1080, 0.5
        %v1113 = vmul.f32 %v1081, 0.5
        %v1114 = vmul.f32 %v1082, 0.5
        %v1115 = vmul.f32 %v1083, 0.5
        %v1116 = vmul.f32 %v1084, 0.5
        %v1117 = vmul.f32 %v1085, 0.5
        %v1118 = vmul.f32 %v1086, 0.5
        %v1119 = vmul.f32 %v1087, 0.5
        %v1120 = vmul.f32 %v1088, 0.5
        %v1121 = vmul.f32 %v1089, 0.5
        %v1122 = vmul.f32 %v1090, 0.5
        %v1123 = vmul.f32 %v1091, 0.5
        %v1124 = vmul.f32 %v1092, 0.5
        %v1125 = vmul.f32 %v1093, 0.5
        %v1126 = vmul.f32 %v1094, 0.5
        %v1127 = vmul.f32 %v1095, 0.5
        %v1128 = vmul.f32 %v1096, 0.5
        %v1129 = vmul.f32 %v1097, 0.5
        %v1130 = vmul.f32 %v1098, 0.5
        %v1131 = vmax.f32 %v925, 0.0
        %v1132 = vmax.f32 %v927, 0.0
        %v1133 = vmax.f32 %v929, 0.0
        %v1134 = vmax.f32 %v931, 0.0
        %v1135 = vmax.f32 %v935, 0.0
        %v1136 = vmax.f32 %v937, 0.0
        %v1137 = vmax.f32 %v939, 0.0
        %v1138 = vmax.f32 %v941, 0.0
        %v1139 = vmax.f32 %v945, 0.0
        %v1140 = vmax.f32 %v947, 0.0
        %v1141 = vmax.f32 %v949, 0.0
        %v1142 = vmax.f32 %v951, 0.0
        %v1143 = vmax.f32 %v955, 0.0
        %v1144 = vmax.f32 %v957, 0.0
        %v1145 = vmax.f32 %v959, 0.0
        %v1146 = vmax.f32 %v961, 0.0
        %v1147 = vmax.f32 %v965, 0.0
        %v1148 = vmax.f32 %v967, 0.0
        %v1149 = vmax.f32 %v969, 0.0
        %v1150 = vmax.f32 %v971, 0.0
        %v1151 = vmax.f32 %v975, 0.0
        %v1152 = vmax.f32 %v977, 0.0
        %v1153 = vmax.f32 %v979, 0.0
        %v1154 = vmax.f32 %v981, 0.0
        %v1155 = vmax.f32 %v985, 0.0
        %v1156 = vmax.f32 %v987, 0.0
        %v1157 = vmax.f32 %v989, 0.0
        %v1158 = vmax.f32 %v991, 0.0
        %v1159 = vmax.f32 %v995, 0.0
        %v1160 = vmax.f32 %v997, 0.0
        %v1161 = vmax.f32 %v999, 0.0
        %v1162 = vmax.f32 %v1001, 0.0
        %v1163 = vsub.f32 %v1131, %v323
        %v1164 = vsub.f32 %v1132, %v324
        %v1165 = vsub.f32 %v1133, %v325
        %v1166 = vsub.f32 %v1134, %v326
        %v1167 = vsub.f32 %v1135, %v327
        %v1168 = vsub.f32 %v1136, %v328
        %v1169 = vsub.f32 %v1137, %v329
        %v1170 = vsub.f32 %v1138, %v330
        %v1171 = vsub.f32 %v1139, %v331
        %v1172 = vsub.f32 %v1140, %v332
        %v1173 = vsub.f32 %v1141, %v333
        %v1174 = vsub.f32 %v1142, %v334
        %v1175 = vsub.f32 %v1143, %v335
        %v1176 = vsub.f32 %v1144, %v336
        %v1177 = vsub.f32 %v1145, %v337
        %v1178 = vsub.f32 %v1146, %v338
        %v1179 = vsub.f32 %v1147, %v339
        %v1180 = vsub.f32 %v1148, %v340
        %v1181 = vsub.f32 %v1149, %v341
        %v1182 = vsub.f32 %v1150, %v342
        %v1183 = vsub.f32 %v1151, %v343
        %v1184 = vsub.f32 %v1152, %v344
        %v1185 = vsub.f32 %v1153, %v345
        %v1186 = vsub.f32 %v1154, %v346
        %v1187 = vsub.f32 %v1155, %v347
        %v1188 = vsub.f32 %v1156, %v348
        %v1189 = vsub.f32 %v1157, %v349
        %v1190 = vsub.f32 %v1158, %v350
        %v1191 = vsub.f32 %v1159, %v351
        %v1192 = vsub.f32 %v1160, %v352
        %v1193 = vsub.f32 %v1161, %v353
        %v1194 = vsub.f32 %v1162, %v354
        %v1195 = vmul.f32 %v1099, %v1163
        %v1196 = vmul.f32 %v1100, %v1164
        %v1197 = vmul.f32 %v1101, %v1165
        %v1198 = vmul.f32 %v1102, %v1166
        %v1199 = vmul.f32 %v1103, %v1167
        %v1200 = vmul.f32 %v1104, %v1168
        %v1201 = vmul.f32 %v1105, %v1169
        %v1202 = vmul.f32 %v1106, %v1170
        %v1203 = vmul.f32 %v1107, %v1171
        %v1204 = vmul.f32 %v1108, %v1172
        %v1205 = vmul.f32 %v1109, %v1173
        %v1206 = vmul.f32 %v1110, %v1174
        %v1207 = vmul.f32 %v1111, %v1175
        %v1208 = vmul.f32 %v1112, %v1176
        %v1209 = vmul.f32 %v1113, %v1177
        %v1210 = vmul.f32 %v1114, %v1178
        %v1211 = vmul.f32 %v1115, %v1179
        %v1212 = vmul.f32 %v1116, %v1180
        %v1213 = vmul.f32 %v1117, %v1181
        %v1214 = vmul.f32 %v1118, %v1182
        %v1215 = vmul.f32 %v1119, %v1183
        %v1216 = vmul.f32 %v1120, %v1184
        %v1217 = vmul.f32 %v1121, %v1185
        %v1218 = vmul.f32 %v1122, %v1186
        %v1219 = vmul.f32 %v1123, %v1187
        %v1220 = vmul.f32 %v1124, %v1188
        %v1221 = vmul.f32 %v1125, %v1189
        %v1222 = vmul.f32 %v1126, %v1190
        %v1223 = vmul.f32 %v1127, %v1191
        %v1224 = vmul.f32 %v1128, %v1192
        %v1225 = vmul.f32 %v1129, %v1193
        %v1226 = vmul.f32 %v1130, %v1194
        %v1227 = vadd.f32 %v323, %v1195
        %v1228 = vadd.f32 %v324, %v1196
        %v1229 = vadd.f32 %v325, %v1197
        %v1230 = vadd.f32 %v326, %v1198
        %v1231 = vadd.f32 %v327, %v1199
        %v1232 = vadd.f32 %v328, %v1200
        %v1233 = vadd.f32 %v329, %v1201
        %v1234 = vadd.f32 %v330, %v1202
        %v1235 = vadd.f32 %v331, %v1203
        %v1236 = vadd.f32 %v332, %v1204
        %v1237 = vadd.f32 %v333, %v1205
        %v1238 = vadd.f32 %v334, %v1206
        %v1239 = vadd.f32 %v335, %v1207
        %v1240 = vadd.f32 %v336, %v1208
        %v1241 = vadd.f32 %v337, %v1209
        %v1242 = vadd.f32 %v338, %v1210
        %v1243 = vadd.f32 %v339, %v1211
        %v1244 = vadd.f32 %v340, %v1212
        %v1245 = vadd.f32 %v341, %v1213
        %v1246 = vadd.f32 %v342, %v1214
        %v1247 = vadd.f32 %v343, %v1215
        %v1248 = vadd.f32 %v344, %v1216
        %v1249 = vadd.f32 %v345, %v1217
        %v1250 = vadd.f32 %v346, %v1218
        %v1251 = vadd.f32 %v347, %v1219
        %v1252 = vadd.f32 %v348, %v1220
        %v1253 = vadd.f32 %v349, %v1221
        %v1254 = vadd.f32 %v350, %v1222
        %v1255 = vadd.f32 %v351, %v1223
        %v1256 = vadd.f32 %v352, %v1224
        %v1257 = vadd.f32 %v353, %v1225
        %v1258 = vadd.f32 %v354, %v1226
        %1259 = vst [vmem:[#allocation2] sm:$0xff] %v1227
        %1260 = vst [vmem:[#allocation2 + $0x8] sm:$0xff] %v1228
        %1261 = vst [vmem:[#allocation2 + $0x10] sm:$0xff] %v1229
        %1262 = vst [vmem:[#allocation2 + $0x18] sm:$0xff] %v1230
        %1263 = vst [vmem:[#allocation2 + $0x20] sm:$0xff] %v1231
        %1264 = vst [vmem:[#allocation2 + $0x28] sm:$0xff] %v1232
        %1265 = vst [vmem:[#allocation2 + $0x30] sm:$0xff] %v1233
        %1266 = vst [vmem:[#allocation2 + $0x38] sm:$0xff] %v1234
        %1267 = vst [vmem:[#allocation2 + $0x40] sm:$0xff] %v1235
        %1268 = vst [vmem:[#allocation2 + $0x48] sm:$0xff] %v1236
        %1269 = vst [vmem:[#allocation2 + $0x50] sm:$0xff] %v1237
        %1270 = vst [vmem:[#allocation2 + $0x58] sm:$0xff] %v1238
        %1271 = vst [vmem:[#allocation2 + $0x60] sm:$0xff] %v1239
        %1272 = vst [vmem:[#allocation2 + $0x68] sm:$0xff] %v1240
        %1273 = vst [vmem:[#allocation2 + $0x70] sm:$0xff] %v1241
        %1274 = vst [vmem:[#allocation2 + $0x78] sm:$0xff] %v1242
        %1275 = vst [vmem:[#allocation2 + $0x80] sm:$0xff] %v1243
        %1276 = vst [vmem:[#allocation2 + $0x88] sm:$0xff] %v1244
        %1277 = vst [vmem:[#allocation2 + $0x90] sm:$0xff] %v1245
        %1278 = vst [vmem:[#allocation2 + $0x98] sm:$0xff] %v1246
        %1279 = vst [vmem:[#allocation2 + $0xa0] sm:$0xff] %v1247
        %1280 = vst [vmem:[#allocation2 + $0xa8] sm:$0xff] %v1248
        %1281 = vst [vmem:[#allocation2 + $0xb0] sm:$0xff] %v1249
        %1282 = vst [vmem:[#allocation2 + $0xb8] sm:$0xff] %v1250
        %1283 = vst [vmem:[#allocation2 + $0xc0] sm:$0xff] %v1251
        %1284 = vst [vmem:[#allocation2 + $0xc8] sm:$0xff] %v1252
        %1285 = vst [vmem:[#allocation2 + $0xd0] sm:$0xff] %v1253
        %1286 = vst [vmem:[#allocation2 + $0xd8] sm:$0xff] %v1254
        %1287 = vst [vmem:[#allocation2 + $0xe0] sm:$0xff] %v1255
        %1288 = vst [vmem:[#allocation2 + $0xe8] sm:$0xff] %v1256
        %1289 = vst [vmem:[#allocation2 + $0xf0] sm:$0xff] %v1257
        %1290 = vst [vmem:[#allocation2 + $0xf8] sm:$0xff] %v1258
        %p1291 = scmp.eq.s32.totalorder %s24, 2
        // Predicated region
        $region49: #{highway_forward_packed.1} parent=31 // pred_check
          %p1292 = pneg %p1291
        $region50: #{highway_forward_packed.1} parent=31 // pred_check_branch
          %1294 = sbr.rel (%p1292) target = $region52
        $region51: #{highway_forward_packed.1} parent=31 // pred_region
          %v1295 = vld [vmem:[#allocation2] sm:$0xff]
          %v1296 = vld [vmem:[#allocation2 + $0x8] sm:$0xff]
          %v1297 = vld [vmem:[#allocation2 + $0x10] sm:$0xff]
          %v1298 = vld [vmem:[#allocation2 + $0x18] sm:$0xff]
          %v1299 = vld [vmem:[#allocation2 + $0x20] sm:$0xff]
          %v1300 = vld [vmem:[#allocation2 + $0x28] sm:$0xff]
          %v1301 = vld [vmem:[#allocation2 + $0x30] sm:$0xff]
          %v1302 = vld [vmem:[#allocation2 + $0x38] sm:$0xff]
          %v1303 = vld [vmem:[#allocation2 + $0x40] sm:$0xff]
          %v1304 = vld [vmem:[#allocation2 + $0x48] sm:$0xff]
          %v1305 = vld [vmem:[#allocation2 + $0x50] sm:$0xff]
          %v1306 = vld [vmem:[#allocation2 + $0x58] sm:$0xff]
          %v1307 = vld [vmem:[#allocation2 + $0x60] sm:$0xff]
          %v1308 = vld [vmem:[#allocation2 + $0x68] sm:$0xff]
          %v1309 = vld [vmem:[#allocation2 + $0x70] sm:$0xff]
          %v1310 = vld [vmem:[#allocation2 + $0x78] sm:$0xff]
          %v1311 = vld [vmem:[#allocation2 + $0x80] sm:$0xff]
          %v1312 = vld [vmem:[#allocation2 + $0x88] sm:$0xff]
          %v1313 = vld [vmem:[#allocation2 + $0x90] sm:$0xff]
          %v1314 = vld [vmem:[#allocation2 + $0x98] sm:$0xff]
          %v1315 = vld [vmem:[#allocation2 + $0xa0] sm:$0xff]
          %v1316 = vld [vmem:[#allocation2 + $0xa8] sm:$0xff]
          %v1317 = vld [vmem:[#allocation2 + $0xb0] sm:$0xff]
          %v1318 = vld [vmem:[#allocation2 + $0xb8] sm:$0xff]
          %v1319 = vld [vmem:[#allocation2 + $0xc0] sm:$0xff]
          %v1320 = vld [vmem:[#allocation2 + $0xc8] sm:$0xff]
          %v1321 = vld [vmem:[#allocation2 + $0xd0] sm:$0xff]
          %v1322 = vld [vmem:[#allocation2 + $0xd8] sm:$0xff]
          %v1323 = vld [vmem:[#allocation2 + $0xe0] sm:$0xff]
          %v1324 = vld [vmem:[#allocation2 + $0xe8] sm:$0xff]
          %v1325 = vld [vmem:[#allocation2 + $0xf0] sm:$0xff]
          %v1326 = vld [vmem:[#allocation2 + $0xf8] sm:$0xff]
          %1327 = vst [vmem:[#allocation9] sm:$0xff] %v1295
          %1328 = vst [vmem:[#allocation9 + $0x8] sm:$0xff] %v1296
          %1329 = vst [vmem:[#allocation9 + $0x10] sm:$0xff] %v1297
          %1330 = vst [vmem:[#allocation9 + $0x18] sm:$0xff] %v1298
          %1331 = vst [vmem:[#allocation9 + $0x20] sm:$0xff] %v1299
          %1332 = vst [vmem:[#allocation9 + $0x28] sm:$0xff] %v1300
          %1333 = vst [vmem:[#allocation9 + $0x30] sm:$0xff] %v1301
          %1334 = vst [vmem:[#allocation9 + $0x38] sm:$0xff] %v1302
          %1335 = vst [vmem:[#allocation9 + $0x40] sm:$0xff] %v1303
          %1336 = vst [vmem:[#allocation9 + $0x48] sm:$0xff] %v1304
          %1337 = vst [vmem:[#allocation9 + $0x50] sm:$0xff] %v1305
          %1338 = vst [vmem:[#allocation9 + $0x58] sm:$0xff] %v1306
          %1339 = vst [vmem:[#allocation9 + $0x60] sm:$0xff] %v1307
          %1340 = vst [vmem:[#allocation9 + $0x68] sm:$0xff] %v1308
          %1341 = vst [vmem:[#allocation9 + $0x70] sm:$0xff] %v1309
          %1342 = vst [vmem:[#allocation9 + $0x78] sm:$0xff] %v1310
          %1343 = vst [vmem:[#allocation9 + $0x80] sm:$0xff] %v1311
          %1344 = vst [vmem:[#allocation9 + $0x88] sm:$0xff] %v1312
          %1345 = vst [vmem:[#allocation9 + $0x90] sm:$0xff] %v1313
          %1346 = vst [vmem:[#allocation9 + $0x98] sm:$0xff] %v1314
          %1347 = vst [vmem:[#allocation9 + $0xa0] sm:$0xff] %v1315
          %1348 = vst [vmem:[#allocation9 + $0xa8] sm:$0xff] %v1316
          %1349 = vst [vmem:[#allocation9 + $0xb0] sm:$0xff] %v1317
          %1350 = vst [vmem:[#allocation9 + $0xb8] sm:$0xff] %v1318
          %1351 = vst [vmem:[#allocation9 + $0xc0] sm:$0xff] %v1319
          %1352 = vst [vmem:[#allocation9 + $0xc8] sm:$0xff] %v1320
          %1353 = vst [vmem:[#allocation9 + $0xd0] sm:$0xff] %v1321
          %1354 = vst [vmem:[#allocation9 + $0xd8] sm:$0xff] %v1322
          %1355 = vst [vmem:[#allocation9 + $0xe0] sm:$0xff] %v1323
          %1356 = vst [vmem:[#allocation9 + $0xe8] sm:$0xff] %v1324
          %1357 = vst [vmem:[#allocation9 + $0xf0] sm:$0xff] %v1325
          %1358 = vst [vmem:[#allocation9 + $0xf8] sm:$0xff] %v1326
        $region52: #{highway_forward_packed.1} parent=31 // pred_fallthru
          _
        // Predicated region
        $region53: #{highway_forward_packed.1} parent=31 // pred_check
          %p1359 = pneg %p127
        $region54: #{highway_forward_packed.1} parent=31 // pred_check_branch
          %1361 = sbr.rel (%p1359) target = $region56
        $region55: #{highway_forward_packed.1} parent=31 // pred_region
          %s1362 = smul.u32 16, %s23
          %s1364 = ssub.s32 4096, 4096
          %1365 = vsyncadd [#allocation5], %s1364
          %s1366 = smul.addr %s1362, 2
          %s1367 = smul.addr %s1366, 128
          %s1368 = scalar_lea.hbm %s3, %s1367
          %s1369 = sshll.u32 [#allocation9], 4
          %s1370 = int_to_ptr.vmem [resolvable:$true] %s1369
          %1375 = dma.vmem_to_hbm [thread:$0]  %s1370, 4096, %s1368, [#allocation5], 256, 256, 16
        $region56: #{highway_forward_packed.1} parent=31 // pred_fallthru
          _
        // Predicated region
        $region57: #{highway_forward_packed.1} parent=31 // pred_check
          %p1376 = pneg %p127
        $region58: #{highway_forward_packed.1} parent=31 // pred_check_branch
          %1378 = sbr.rel (%p1376) target = $region60
        $region59: #{highway_forward_packed.1} parent=31 // pred_region
          %1379 = dma.done [#allocation5], 4096
        $region60: #{highway_forward_packed.1} parent=31 // pred_fallthru
          _
      $region32: #{highway_forward_packed.1} parent=5 // pred_fallthru
        _
      %p1380 = scmp.le.s32.totalorder 2, %s14
      // Predicated region
      $region61: #{highway_forward_packed.1} parent=5 // pred_check
        %p1381 = pneg %p1380
      $region62: #{highway_forward_packed.1} parent=5 // pred_check_branch
        %1383 = sbr.rel (%p1381) target = $region64
      $region63: #{highway_forward_packed.1} parent=5 // pred_region
        %s1384 = ssub.s32 %s14, 2
      $region64: #{highway_forward_packed.1} parent=5 // pred_fallthru
        _
    $region6: #{highway_forward_packed.1} parent=1 // loop_footer
      %s18 = sadd.s32 1, %s14
    $region7: #{highway_forward_packed.1} parent=1 // loop_footer_branch
      %13 = sbr.rel target = $region3
    $region8: #{highway_forward_packed.1} parent=1 // loop_exit
      _
    %1385 = vsyncpa [#allocation4], 1
    %s1386 = scalar_lea.sflag [#allocation4], 1
    %1387 = vsyncpa %s1386, 1
    %1388 = vsyncpa [#allocation7], 1
    %s1389 = scalar_lea.sflag [#allocation7], 1
    %1390 = vsyncpa %s1389, 1
    %1391 = vsyncpa [#allocation5], 1
    %s1392 = scalar_lea.sflag [#allocation5], 1
    %1393 = vsyncpa %s1392, 1

</llo_original>
